<compile_context>
chip_gen: v5e
topology: v5e:2x2
jax: 0.10.0
libtpu: 0.0.40
codegen_flags: <defaults>
</compile_context>

<pallas_src>
import functools
import math

import jax
import jax.numpy as jnp
from jax.experimental import pallas as pl
from jax.experimental.pallas import tpu as pltpu

_VMEM_LIMIT = 48 * 1024 * 1024  # fits v5e/v6e (128 MiB) and v7x (64 MiB) with headroom


def _round_up(x, m):
    return -(-x // m) * m


def _tile(dim, pref, align):
    """Pick a tile size: small dims round up to `align`; large dims prefer `pref` or a
    slightly smaller divisor of dim to avoid padding waste."""
    if dim <= pref:
        return _round_up(dim, align)
    for cand in (pref, (pref // 4) * 3, pref // 2):
        if cand >= align and cand % align == 0 and dim % cand == 0:
            return cand
    return pref  # dim will be padded up to a multiple of pref


# ----------------------------------------------------------------------------
# Shared GEMM epilogue: +bias, GELU, +residual, cast/store.
# ----------------------------------------------------------------------------
def _mm_epilogue(y, b_ref, r_ref, activation, o_ref):
    if b_ref is not None:
        y = y + b_ref[...]
    if activation == "gelu":
        # TODO(synk): open_clip uses exact (erf) GELU; tanh approximation used here.
        y = jax.nn.gelu(y, approximate=True)
    if r_ref is not None:
        y = y + r_ref[...].astype(jnp.float32)
    o_ref[...] = y.astype(o_ref.dtype)


# ----------------------------------------------------------------------------
# Tiled matmul (+ optional bias / GELU / fused residual add)
# ----------------------------------------------------------------------------
def _matmul_kernel_multi_k(*refs, has_bias, has_residual, activation):
    x_ref, w_ref = refs[0], refs[1]
    i = 2
    b_ref = refs[i] if has_bias else None
    i += int(has_bias)
    r_ref = refs[i] if has_residual else None
    i += int(has_residual)
    o_ref, acc_ref = refs[i], refs[i + 1]

    k = pl.program_id(2)

    @pl.when(k == 0)
    def _():
        acc_ref[...] = jnp.zeros_like(acc_ref)

    acc_ref[...] += jnp.dot(x_ref[...], w_ref[...],
                            preferred_element_type=jnp.float32)

    @pl.when(k == pl.num_programs(2) - 1)
    def _():
        _mm_epilogue(acc_ref[...], b_ref, r_ref, activation, o_ref)


def _matmul_kernel_single_k(*refs, has_bias, has_residual, activation):
    x_ref, w_ref = refs[0], refs[1]
    i = 2
    b_ref = refs[i] if has_bias else None
    i += int(has_bias)
    r_ref = refs[i] if has_residual else None
    i += int(has_residual)
    o_ref = refs[i]
    y = jnp.dot(x_ref[...], w_ref[...], preferred_element_type=jnp.float32)
    _mm_epilogue(y, b_ref, r_ref, activation, o_ref)


def matmul(x, w, bias=None, residual=None, activation=None,
           out_dtype=jnp.bfloat16, tm=512, tn=512, tk=1024):
    """x:(M,K) @ w:(K,N) [+bias] [gelu] [+residual] -> (M,N); bf16 in, f32 accumulation.
    M/N/K are zero-padded to tile multiples (result sliced back)."""
    M, K = x.shape
    N = w.shape[1]
    tm, tn, tk = _tile(M, tm, 8), _tile(N, tn, 128), _tile(K, tk, 128)
    Mp, Np, Kp = _round_up(M, tm), _round_up(N, tn), _round_up(K, tk)

    xp = x if (Mp, Kp) == (M, K) else jnp.pad(x, ((0, Mp - M), (0, Kp - K)))
    wp = w if (Kp, Np) == (K, N) else jnp.pad(w, ((0, Kp - K), (0, Np - N)))

    nk = Kp // tk
    if nk == 1:
        grid = (Mp // tm, Np // tn)
        x_map = lambda i, j: (i, 0)
        w_map = lambda i, j: (0, j)
        o_map = lambda i, j: (i, j)
        v_map = lambda i, j: (0, j)
        r_map = lambda i, j: (i, j)
        kernel = functools.partial(_matmul_kernel_single_k, has_bias=bias is not None,
                                   has_residual=residual is not None, activation=activation)
        scratch = []
        dims = ("parallel", "parallel")
    else:
        grid = (Mp // tm, Np // tn, nk)
        x_map = lambda i, j, k: (i, k)
        w_map = lambda i, j, k: (k, j)
        o_map = lambda i, j, k: (i, j)
        v_map = lambda i, j, k: (0, j)
        r_map = lambda i, j, k: (i, j)
        kernel = functools.partial(_matmul_kernel_multi_k, has_bias=bias is not None,
                                   has_residual=residual is not None, activation=activation)
        scratch = [pltpu.VMEM((tm, tn), jnp.float32)]
        dims = ("parallel", "parallel", "arbitrary")

    in_specs = [pl.BlockSpec((tm, tk), x_map), pl.BlockSpec((tk, tn), w_map)]
    args = [xp, wp]
    if bias is not None:
        bp = bias.reshape(1, N).astype(jnp.float32)
        if Np != N:
            bp = jnp.pad(bp, ((0, 0), (0, Np - N)))
        in_specs.append(pl.BlockSpec((1, tn), v_map))
        args.append(bp)
    if residual is not None:
        rp = residual if (Mp, Np) == (M, N) else jnp.pad(
            residual, ((0, Mp - M), (0, Np - N)))
        in_specs.append(pl.BlockSpec((tm, tn), r_map))
        args.append(rp)

    out = pl.pallas_call(
        kernel,
        grid=grid,
        out_shape=jax.ShapeDtypeStruct((Mp, Np), out_dtype),
        in_specs=in_specs,
        out_specs=pl.BlockSpec((tm, tn), o_map),
        scratch_shapes=scratch,
        compiler_params=pltpu.CompilerParams(
            dimension_semantics=dims, vmem_limit_bytes=_VMEM_LIMIT),
    )(*args)
    if (Mp, Np) != (M, N):
        out = out[:M, :N]
    return out


# ----------------------------------------------------------------------------
# Fused LayerNorm -> matmul (+ optional bias / GELU).  Full K (= width) per block; the
# normalized row-block is computed once (j == 0) into a VMEM scratch and reused across
# the N tiles, so LN stats are not recomputed per output tile.
# ----------------------------------------------------------------------------
def _ln_matmul_kernel(*refs, eps, has_bias, activation):
    x_ref, g_ref, be_ref, w_ref = refs[0], refs[1], refs[2], refs[3]
    i = 4
    b_ref = refs[i] if has_bias else None
    i += int(has_bias)
    o_ref, xn_ref = refs[i], refs[i + 1]

    @pl.when(pl.program_id(1) == 0)
    def _():
        x = x_ref[...].astype(jnp.float32)
        mu = jnp.mean(x, axis=-1, keepdims=True)
        var = jnp.mean(jnp.square(x - mu), axis=-1, keepdims=True)
        xn = (x - mu) * jax.lax.rsqrt(var + eps)
        xn_ref[...] = (xn * g_ref[...] + be_ref[...]).astype(xn_ref.dtype)

    y = jnp.dot(xn_ref[...], w_ref[...], preferred_element_type=jnp.float32)
    _mm_epilogue(y, b_ref, None, activation, o_ref)


def ln_matmul(x, gamma, beta, w, bias=None, activation=None,
              out_dtype=jnp.bfloat16, tm=512, tn=512, eps=1e-5):
    M, K = x.shape
    N = w.shape[1]
    assert K % 128 == 0, "LayerNorm axis (width) must be lane-aligned"
    tm, tn = _tile(M, tm, 8), _tile(N, tn, 128)
    Mp, Np = _round_up(M, tm), _round_up(N, tn)

    xp = x if Mp == M else jnp.pad(x, ((0, Mp - M), (0, 0)))
    wp = w if Np == N else jnp.pad(w, ((0, 0), (0, Np - N)))

    in_specs = [
        pl.BlockSpec((tm, K), lambda i, j: (i, 0)),
        pl.BlockSpec((1, K), lambda i, j: (0, 0)),
        pl.BlockSpec((1, K), lambda i, j: (0, 0)),
        pl.BlockSpec((K, tn), lambda i, j: (0, j)),
    ]
    args = [xp, gamma.reshape(1, K).astype(jnp.float32),
            beta.reshape(1, K).astype(jnp.float32), wp]
    if bias is not None:
        bp = bias.reshape(1, N).astype(jnp.float32)
        if Np != N:
            bp = jnp.pad(bp, ((0, 0), (0, Np - N)))
        in_specs.append(pl.BlockSpec((1, tn), lambda i, j: (0, j)))
        args.append(bp)

    kernel = functools.partial(_ln_matmul_kernel, eps=eps,
                               has_bias=bias is not None, activation=activation)
    out = pl.pallas_call(
        kernel,
        grid=(Mp // tm, Np // tn),
        out_shape=jax.ShapeDtypeStruct((Mp, Np), out_dtype),
        in_specs=in_specs,
        out_specs=pl.BlockSpec((tm, tn), lambda i, j: (i, j)),
        scratch_shapes=[pltpu.VMEM((tm, K), jnp.bfloat16)],
        compiler_params=pltpu.CompilerParams(
            dimension_semantics=("parallel", "arbitrary"),  # j sequential: LN cache valid
            vmem_limit_bytes=_VMEM_LIMIT),
    )(*args)
    if (Mp, Np) != (M, N):
        out = out[:M, :N]
    return out


# ----------------------------------------------------------------------------
# Standalone LayerNorm (only needed for ln_pre), tiled over rows with M padding.
# ----------------------------------------------------------------------------
def _layernorm_kernel(x_ref, g_ref, b_ref, o_ref, *, eps):
    x = x_ref[...].astype(jnp.float32)
    mu = jnp.mean(x, axis=-1, keepdims=True)
    var = jnp.mean(jnp.square(x - mu), axis=-1, keepdims=True)
    y = (x - mu) * jax.lax.rsqrt(var + eps)
    o_ref[...] = (y * g_ref[...] + b_ref[...]).astype(o_ref.dtype)


def layernorm(x, g, b, eps=1e-5, out_dtype=jnp.bfloat16, tm=512):
    M, D = x.shape
    tm = _tile(M, tm, 8)
    Mp = _round_up(M, tm)
    xp = x if Mp == M else jnp.pad(x, ((0, Mp - M), (0, 0)))
    out = pl.pallas_call(
        functools.partial(_layernorm_kernel, eps=eps),
        grid=(Mp // tm,),
        out_shape=jax.ShapeDtypeStruct((Mp, D), out_dtype),
        in_specs=[
            pl.BlockSpec((tm, D), lambda i: (i, 0)),
            pl.BlockSpec((1, D), lambda i: (0, 0)),
            pl.BlockSpec((1, D), lambda i: (0, 0)),
        ],
        out_specs=pl.BlockSpec((tm, D), lambda i: (i, 0)),
        compiler_params=pltpu.CompilerParams(
            dimension_semantics=("parallel",), vmem_limit_bytes=_VMEM_LIMIT),
    )(xp, g.reshape(1, D).astype(jnp.float32), b.reshape(1, D).astype(jnp.float32))
    return out[:M] if Mp != M else out


# ----------------------------------------------------------------------------
# Multi-head self-attention fused with out_proj (+bias +residual).
# Grid = (batch-blocks, head-groups).  A head-group is hpg heads so its q/k/v column
# slice of the fused (S, 3*width) QKV block is 128-lane aligned (dh=64 -> pairs).
# Per-head outputs are immediately projected through the matching rows of W_out and
# accumulated into a (bb, S, width) f32 VMEM scratch; the lane-dense (width) output is
# written once per batch-block together with bias + residual.
# ----------------------------------------------------------------------------
def _attention_kernel(q_ref, k_ref, v_ref, wo_ref, bo_ref, r_ref, o_ref, acc_ref,
                      *, scale, dh, hpg, s_valid):
    h = pl.program_id(1)

    @pl.when(h == 0)
    def _():
        acc_ref[...] = jnp.zeros_like(acc_ref)

    bb, S = q_ref.shape[0], q_ref.shape[1]
    kmask = None
    if s_valid < S:
        kmask = jax.lax.broadcasted_iota(jnp.int32, (1, S), 1) < s_valid

    for b in range(bb):          # static, small (<=4)
        part = None
        for hh in range(hpg):    # static, 1-2 heads per 128-lane group
            sl = slice(hh * dh, (hh + 1) * dh)
            # fold softmax scale into the (S, dh) q tile (f32 mul, cast back to bf16)
            q = (q_ref[b, :, sl].astype(jnp.float32) * scale).astype(k_ref.dtype)
            s = jax.lax.dot_general(q, k_ref[b, :, sl], (((1,), (1,)), ((), ())),
                                    preferred_element_type=jnp.float32)   # (S, S)
            if kmask is not None:
                s = jnp.where(kmask, s, -jnp.inf)                         # mask padded keys
            m = jnp.max(s, axis=-1, keepdims=True)
            p = jnp.exp(s - m)
            p = p * pl.reciprocal(jnp.sum(p, axis=-1, keepdims=True), approx=True)
            o = jnp.dot(p.astype(v_ref.dtype), v_ref[b, :, sl],
                        preferred_element_type=jnp.float32)               # (S, dh)
            contrib = jnp.dot(o.astype(wo_ref.dtype), wo_ref[sl, :],
                              preferred_element_type=jnp.float32)         # (S, width)
            part = contrib if part is None else part + contrib
        acc_ref[b, :, :] += part

    @pl.when(h == pl.num_programs(1) - 1)
    def _():
        y = acc_ref[...] + bo_ref[...] + r_ref[...].astype(jnp.float32)
        o_ref[...] = y.astype(o_ref.dtype)


def attention_outproj(qkv, w_out, b_out, residual, heads, scale, s_valid):
    """qkv: (B, S, 3*width) fused projection -> residual + out_proj(attention): (B, S, width)."""
    B, S, threew = qkv.shape
    width = threew // 3
    assert width % 128 == 0
    dh = width // heads
    hpg = 128 // math.gcd(dh, 128)        # heads per 128-lane-aligned group
    if heads % hpg != 0:
        hpg = heads                       # fallback: whole width per step (still 128-aligned)
    nh = heads // hpg
    gw = hpg * dh
    bb = next(b for b in (4, 2, 1) if B % b == 0)   # batch elements per grid step

    kernel = functools.partial(_attention_kernel, scale=scale, dh=dh, hpg=hpg,
                               s_valid=s_valid)
    return pl.pallas_call(
        kernel,
        grid=(B // bb, nh),
        out_shape=jax.ShapeDtypeStruct((B, S, width), jnp.bfloat16),
        in_specs=[
            pl.BlockSpec((bb, S, gw), lambda b, h: (b, 0, h)),            # Q columns
            pl.BlockSpec((bb, S, gw), lambda b, h: (b, 0, nh + h)),       # K columns
            pl.BlockSpec((bb, S, gw), lambda b, h: (b, 0, 2 * nh + h)),   # V columns
            pl.BlockSpec((gw, width), lambda b, h: (h, 0)),               # W_out row block
            pl.BlockSpec((1, 1, width), lambda b, h: (0, 0, 0)),          # out_proj bias
            pl.BlockSpec((bb, S, width), lambda b, h: (b, 0, 0)),         # residual
        ],
        out_specs=pl.BlockSpec((bb, S, width), lambda b, h: (b, 0, 0)),
        scratch_shapes=[pltpu.VMEM((bb, S, width), jnp.float32)],
        compiler_params=pltpu.CompilerParams(
            dimension_semantics=("parallel", "arbitrary"),
            vmem_limit_bytes=_VMEM_LIMIT),
    )(qkv, qkv, qkv, w_out, b_out.reshape(1, 1, width).astype(jnp.float32), residual)


# ----------------------------------------------------------------------------
# Synthetic CLIP ViT parameters (deterministic init; no checkpoint load)
# ----------------------------------------------------------------------------
def init_params(key, *, C, P, width, heads, layers, out_dim, seq):
    wdt = jnp.bfloat16  # weights/activations bf16; biases & LN params f32

    def nrm(k, shape, std=0.02, dtype=wdt):
        return (std * jax.random.normal(k, shape, jnp.float32)).astype(dtype)

    keys = jax.random.split(key, 8 + layers)
    conv_w_torch = 0.02 * jax.random.normal(keys[0], (width, C, P, P), jnp.float32)
    params = {
        "patch": P,
        "heads": heads,
        "conv_w": conv_w_torch.reshape(width, C * P * P).T.astype(wdt),  # (C*P*P, width)
        "class_embedding": nrm(keys[1], (width,)),
        "positional_embedding": nrm(keys[2], (seq, width)),
        "ln_pre_g": jnp.ones((width,), jnp.float32),
        "ln_pre_b": jnp.zeros((width,), jnp.float32),
        "ln_post_g": jnp.ones((width,), jnp.float32),
        "ln_post_b": jnp.zeros((width,), jnp.float32),
        "proj": nrm(keys[3], (width, out_dim)),
        "blocks": [],
    }
    for l in range(layers):
        bk = jax.random.split(keys[8 + l], 6)
        params["blocks"].append({
            "ln1_g": jnp.ones((width,), jnp.float32),
            "ln1_b": jnp.zeros((width,), jnp.float32),
            "ln2_g": jnp.ones((width,), jnp.float32),
            "ln2_b": jnp.zeros((width,), jnp.float32),
            # PyTorch stores Linear/MHA weights as (out, in); keep transposed for x @ W.
            "in_proj_w": nrm(bk[0], (3 * width, width)).T,
            "in_proj_b": nrm(bk[1], (3 * width,), dtype=jnp.float32),
            "out_proj_w": nrm(bk[2], (width, width)).T,
            "out_proj_b": nrm(bk[3], (width,), dtype=jnp.float32),
            "fc1_w": nrm(bk[4], (4 * width, width)).T,
            "fc1_b": jnp.zeros((4 * width,), jnp.float32),
            "fc2_w": nrm(bk[5], (width, 4 * width)).T,
            "fc2_b": jnp.zeros((width,), jnp.float32),
        })
    return params


# ----------------------------------------------------------------------------
# Forward pass: CLIPEncoder.forward(images) == model.encode_image(images)
# ----------------------------------------------------------------------------
def clip_encode_image(params, images):
    B, C, H, W = images.shape
    P = params["patch"]
    gh, gw = H // P, W // P
    width = params["class_embedding"].shape[0]

    # Patch embedding: Conv2d(C, width, kernel=stride=P, bias=False) as a matmul.
    images = images.astype(jnp.bfloat16)                 # halve HBM bytes of the transpose
    patches = images.reshape(B, C, gh, P, gw, P).transpose(0, 2, 4, 1, 3, 5)
    patches = patches.reshape(B * gh * gw, C * P * P)
    x = matmul(patches, params["conv_w"])                # no bias
    x = x.reshape(B, gh * gw, width)

    # Prepend class token, add positional embedding (bf16 residual stream).
    cls = jnp.broadcast_to(params["class_embedding"].astype(jnp.bfloat16), (B, 1, width))
    x = jnp.concatenate([cls, x], axis=1)                # (B, S_valid, width)
    S_valid = x.shape[1]
    x = x + params["positional_embedding"].astype(jnp.bfloat16)[None]

    # Pad sequence to a TPU-friendly length; padded keys are masked inside attention, so
    # padded rows never contaminate real tokens, and all GEMM/attention blocks stay aligned.
    S = _round_up(S_valid, 8)
    if S != S_valid:
        x = jnp.pad(x, ((0, 0), (0, S - S_valid), (0, 0)))

    # ln_pre (must materialize: it feeds the residual stream directly).
    x = layernorm(x.reshape(B * S, width), params["ln_pre_g"], params["ln_pre_b"])

    heads = params["heads"]
    scale = 1.0 / math.sqrt(width // heads)

    for blk in params["blocks"]:
        # --- MHSA sub-block: fused ln1+in_proj, then attention fused with out_proj+residual ---
        qkv = ln_matmul(x, blk["ln1_g"], blk["ln1_b"],
                        blk["in_proj_w"], bias=blk["in_proj_b"])          # (B*S, 3*width)
        x = attention_outproj(qkv.reshape(B, S, 3 * width), blk["out_proj_w"],
                              blk["out_proj_b"], x.reshape(B, S, width),
                              heads, scale, S_valid)                      # x + out_proj(attn)
        x = x.reshape(B * S, width)

        # --- MLP sub-block: fused ln2+fc1+GELU, fc2+bias+residual ---
        h1 = ln_matmul(x, blk["ln2_g"], blk["ln2_b"],
                       blk["fc1_w"], bias=blk["fc1_b"], activation="gelu")
        x = matmul(h1, blk["fc2_w"], bias=blk["fc2_b"], residual=x)       # x + fc2(gelu(fc1))

    # ln_post on class token fused with the final projection (no bias).
    cls_tok = x.reshape(B, S, width)[:, 0, :]
    feats = ln_matmul(cls_tok, params["ln_post_g"], params["ln_post_b"],
                      params["proj"], out_dtype=jnp.float32)
    return feats  # (B, out_dim)


if __name__ == "__main__":
    key = jax.random.PRNGKey(0)
    k_img, k_par, k_a, k_b = jax.random.split(key, 4)

    # Tiny self-check of the multi-K accumulator GEMM path (the small demo net below is
    # single-K everywhere): bf16 inputs, f32 accumulation on both sides.
    xa = (0.1 * jax.random.normal(k_a, (64, 2048), jnp.float32)).astype(jnp.bfloat16)
    wb = (0.1 * jax.random.normal(k_b, (2048, 256), jnp.float32)).astype(jnp.bfloat16)
    got = matmul(xa, wb, out_dtype=jnp.float32)
    ref = jnp.dot(xa.astype(jnp.float32), wb.astype(jnp.float32))
    jax.block_until_ready(got)
    assert jnp.allclose(got, ref, rtol=1e-2, atol=1e-2)

    # Small, ViT-consistent shapes: 32x32 image, patch 16 -> 4 patches + CLS = seq 5 (padded
    # to 8 in the forward pass); width=128, heads=2 -> dh=64, exercising the head-pair path.
    B, C, H, W = 2, 3, 32, 32
    P, width, heads, layers, out_dim = 16, 128, 2, 2, 64
    seq = (H // P) * (W // P) + 1

    images = jax.random.normal(k_img, (B, C, H, W), jnp.float32)
    params = init_params(k_par, C=C, P=P, width=width, heads=heads,
                         layers=layers, out_dim=out_dim, seq=seq)

    feats = clip_encode_image(params, images)
    jax.block_until_ready(feats)
    assert feats.shape == (B, out_dim) and feats.dtype == jnp.float32
    assert bool(jnp.all(jnp.isfinite(feats)))
    print("KERNEL_OK")
</pallas_src>

<mosaic_0001>
module attributes {stable_mosaic.version = 11 : i64} {
  func.func @_matmul_kernel_multi_k(%arg0: i32, %arg1: i32, %arg2: i32, %arg3: memref<64x1024xbf16, #tpu.memory_space<vmem>>, %arg4: memref<1024x256xbf16, #tpu.memory_space<vmem>>, %arg5: memref<64x256xf32, #tpu.memory_space<vmem>>, %arg6: memref<64x256xf32, #tpu.memory_space<vmem>>) attributes {dimension_semantics = [#tpu.dimension_semantics<parallel>, #tpu.dimension_semantics<parallel>, #tpu.dimension_semantics<arbitrary>], iteration_bounds = array<i64: 1, 1, 2>, scalar_prefetch = 0 : i64, scratch_operands = 1 : i64, tpu.core_type = #tpu.core_type<tc>, window_params = [{transform_indices = @transform_0, window_bounds = array<i64: 64, 1024>}, {transform_indices = @transform_1, window_bounds = array<i64: 1024, 256>}, {transform_indices = @transform_2, window_bounds = array<i64: 64, 256>}]} {
    %c0_i32 = arith.constant 0 : i32
    %0 = arith.cmpi eq, %arg2, %c0_i32 : i32
    %1 = arith.extui %0 : i1 to i32
    %c0_i32_0 = arith.constant 0 : i32
    %2 = arith.cmpi ne, %1, %c0_i32_0 : i32
    scf.if %2 {
      %cst_9 = arith.constant 0.000000e+00 : f32
      %12 = vector.broadcast %cst_9 : f32 to vector<64x256xf32>
      %c0_10 = arith.constant 0 : index
      %c0_11 = arith.constant 0 : index
      %13 = vector.load %arg6[%c0_10, %c0_11] : memref<64x256xf32, #tpu.memory_space<vmem>>, vector<64x256xf32>
      tpu.vector_store %arg6[%c0_10, %c0_11], %12 {strides = array<i32>} : memref<64x256xf32, #tpu.memory_space<vmem>>, vector<64x256xf32>,
    } else {
    }
    %c0 = arith.constant 0 : index
    %c0_1 = arith.constant 0 : index
    %3 = vector.load %arg6[%c0, %c0_1] : memref<64x256xf32, #tpu.memory_space<vmem>>, vector<64x256xf32>
    %c0_2 = arith.constant 0 : index
    %c0_3 = arith.constant 0 : index
    %4 = vector.load %arg3[%c0_2, %c0_3] : memref<64x1024xbf16, #tpu.memory_space<vmem>>, vector<64x1024xbf16>
    %c0_4 = arith.constant 0 : index
    %c0_5 = arith.constant 0 : index
    %5 = vector.load %arg4[%c0_4, %c0_5] : memref<1024x256xbf16, #tpu.memory_space<vmem>>, vector<1024x256xbf16>
    %cst = arith.constant dense<0.000000e+00> : vector<64x256xf32>
    %6 = tpu.matmul %4, %5, %cst {dimension_numbers = #tpu.dot_dimension_numbers<[1], [0], [0], [1], [0, 0, 1, 1], [], []>} : vector<64x1024xbf16>, vector<1024x256xbf16>, vector<64x256xf32> -> vector<64x256xf32>
    %7 = arith.addf %3, %6 : vector<64x256xf32>
    %c0_6 = arith.constant 0 : index
    %c0_7 = arith.constant 0 : index
    %8 = vector.load %arg6[%c0_6, %c0_7] : memref<64x256xf32, #tpu.memory_space<vmem>>, vector<64x256xf32>
    tpu.vector_store %arg6[%c0_6, %c0_7], %7 {strides = array<i32>} : memref<64x256xf32, #tpu.memory_space<vmem>>, vector<64x256xf32>,
    %c1_i32 = arith.constant 1 : i32
    %9 = arith.cmpi eq, %arg2, %c1_i32 : i32
    %10 = arith.extui %9 : i1 to i32
    %c0_i32_8 = arith.constant 0 : i32
    %11 = arith.cmpi ne, %10, %c0_i32_8 : i32
    scf.if %11 {
      %c0_9 = arith.constant 0 : index
      %c0_10 = arith.constant 0 : index
      %12 = vector.load %arg6[%c0_9, %c0_10] : memref<64x256xf32, #tpu.memory_space<vmem>>, vector<64x256xf32>
      %c0_11 = arith.constant 0 : index
      %c0_12 = arith.constant 0 : index
      %13 = vector.load %arg5[%c0_11, %c0_12] : memref<64x256xf32, #tpu.memory_space<vmem>>, vector<64x256xf32>
      tpu.vector_store %arg5[%c0_11, %c0_12], %12 {strides = array<i32>} : memref<64x256xf32, #tpu.memory_space<vmem>>, vector<64x256xf32>,
    } else {
    }
    return
  }
  func.func @transform_0(%arg0: i32, %arg1: i32, %arg2: i32) -> (i32, i32) {
    %c0_i32 = arith.constant 0 : i32
    return %arg0, %arg2 : i32, i32
  }
  func.func @transform_1(%arg0: i32, %arg1: i32, %arg2: i32) -> (i32, i32) {
    %c0_i32 = arith.constant 0 : i32
    return %arg2, %arg1 : i32, i32
  }
  func.func @transform_2(%arg0: i32, %arg1: i32, %arg2: i32) -> (i32, i32) {
    %c0_i32 = arith.constant 0 : i32
    return %arg0, %arg1 : i32, i32
  }
}

</mosaic_0001>

<llo_original>
// kernel: tpu_custom_call.1
$region0: #{tpu_custom_call.1}
  #allocation0 [shape = 'u32[]', space=smem, size = 0x4, offset = 0x4, fixed_abs, tag = 'smem constant byte address 0x4 - core index']
  #allocation1 [shape = 'u32[72,128]{1,0:T(1,128)}', space=vmem, size = 0x9000, scoped, tag = 'internal scratch']
  #allocation2 [shape = 'f32[64,256]{1,0:T(8,128)}', space=vmem, size = 0x10000, scoped, tag = 'scratch operand']
  %s0 = inlined_call_operand.hbm [shape: bf16[64,2048], index: 0, kind: input, shape index: {}]
  %s1 = inlined_call_operand.hbm [shape: bf16[2048,256], index: 1, kind: input, shape index: {}]
  %s2 = inlined_call_operand.hbm [shape: f32[64,256], index: 2, kind: output, shape index: {}]
  %s3 = sld [smem:[#allocation0]]
  $region57: #{tpu_custom_call.1} parent=0
    _
  %s5 = ssub.s32 1, %s3
  %s6 = scalar_select 0, %s5, %s3
  $region1: #{tpu_custom_call.1} parent=0
    #allocation3 [shape = 'u8[262144]{0}', space=vmem, size = 0x40000, scoped, tag = 'input window, operand 0']
    #allocation4 [shape = 's32[2]{0}', space=sflag, size = 0x8, scoped, tag = 'scoped memory for tpu_custom_call.1']
    #allocation5 [shape = 's32[2]{0}', space=sflag, size = 0x8, scoped, tag = 'scoped memory for tpu_custom_call.1']
    #allocation6 [shape = 'u8[1048576]{0}', space=vmem, size = 0x100000, scoped, tag = 'input window, operand 1']
    #allocation7 [shape = 's32[2]{0}', space=sflag, size = 0x8, scoped, tag = 'scoped memory for tpu_custom_call.1']
    #allocation8 [shape = 'u8[65536]{0}', space=vmem, size = 0x10000, scoped, tag = 'output window, operand 0, single buffered']
    %7 = vsyncpa [#allocation4], 0
    %s8 = scalar_lea.sflag [#allocation4], 1
    %9 = vsyncpa %s8, 0
    %10 = vsyncpa [#allocation7], 0
    %s11 = scalar_lea.sflag [#allocation7], 1
    %12 = vsyncpa %s11, 0
    %13 = vsyncpa [#allocation5], 0
    loop: start=0, step=1, limit=4
    $region2: #{tpu_custom_call.1} parent=1 // loop_pre_header
      _
    $region3: #{tpu_custom_call.1} parent=1 // loop_header
      %s15 = sphi 0, %s19
      %p16 = scmp.ge.s32.totalorder %s15, 4
      %s22 = sphi 0, %s41
      %s23 = sphi 0, %s37
      %s24 = sphi 0, %s33
      %s25 = sphi 0, %s22
      %s26 = sphi 0, %s23
      %s27 = sphi 0, %s24
      %s28 = sphi 0, %s25
      %s29 = sphi 0, %s26
      %s30 = sphi 0, %s27
      %s46 = sphi 0, %s48
      %s49 = sphi 0, %s46
      %s50 = sphi 0, %s49
      %s66 = sphi 0, %s50
      %s74 = sphi 0, %s76
      %s77 = sphi 0, %s74
      %s78 = sphi 0, %s77
      %s94 = sphi 0, %s78
      %s102 = sphi 0, %s104
      %s105 = sphi 0, %s102
      %s106 = sphi 0, %s105
      %s122 = sphi 0, %s106
    $region4: #{tpu_custom_call.1} parent=1 // loop_header_branch
      %18 = sbr.rel (%p16) target = $region8
    $region5: #{tpu_custom_call.1} parent=1 // loop_body
      %s20 = ssub.s32 %s15, 1
      %s21 = ssub.s32 %s15, 2
      %s31 = sadd.s32 1, %s24
      %p32 = scmp.ge.s32.totalorder %s31, 2
      %s33 = scalar_select %p32, 0, %s31
      %s34 = sadd.s32 1, %s23
      %s35 = scalar_select %p32, %s34, %s23
      %p36 = scmp.ge.s32.totalorder %s35, 1
      %s37 = scalar_select %p36, 0, %s35
      %s38 = sadd.s32 1, %s22
      %s39 = scalar_select %p36, %s38, %s22
      %p40 = scmp.ge.s32.totalorder %s39, 1
      %s41 = scalar_select %p40, 0, %s39
      %s42 = ssub.s32 %s22, %s41
      %s43 = ssub.s32 %s24, %s33
      %s44 = sor.u32 %s42, %s43
      %p45 = scmp.eq.s32.totalorder %s44, 0
      %s47 = sadd.s32 %s46, 1
      %s48 = scalar_select %p45, %s46, %s47
      %p51 = pneg %p45
      %p52 = scmp.eq.s32.totalorder %s15, 1
      %p53 = por %p51, %p52
      %p54 = scmp.ne.s32.totalorder %s46, %s49
      %p55 = scmp.eq.s32.totalorder %s15, 0
      %p56 = por %p54, %p55
      %p57 = scmp.ne.s32.totalorder %s46, %s49
      %p58 = scmp.eq.s32.totalorder %s20, 1
      %p59 = por %p57, %p58
      %p60 = scmp.ne.s32.totalorder %s49, %s50
      %p61 = scmp.eq.s32.totalorder %s20, 0
      %p62 = por %p60, %p61
      %p63 = scmp.ne.s32.totalorder %s49, %s50
      %p64 = scmp.eq.s32.totalorder %s21, 1
      %p65 = por %p63, %p64
      %p67 = scmp.ne.s32.totalorder %s50, %s66
      %p68 = scmp.eq.s32.totalorder %s21, 0
      %p69 = por %p67, %p68
      %s70 = ssub.s32 %s24, %s33
      %s71 = ssub.s32 %s23, %s37
      %s72 = sor.u32 %s70, %s71
      %p73 = scmp.eq.s32.totalorder %s72, 0
      %s75 = sadd.s32 %s74, 1
      %s76 = scalar_select %p73, %s74, %s75
      %p79 = pneg %p73
      %p80 = scmp.eq.s32.totalorder %s15, 1
      %p81 = por %p79, %p80
      %p82 = scmp.ne.s32.totalorder %s74, %s77
      %p83 = scmp.eq.s32.totalorder %s15, 0
      %p84 = por %p82, %p83
      %p85 = scmp.ne.s32.totalorder %s74, %s77
      %p86 = scmp.eq.s32.totalorder %s20, 1
      %p87 = por %p85, %p86
      %p88 = scmp.ne.s32.totalorder %s77, %s78
      %p89 = scmp.eq.s32.totalorder %s20, 0
      %p90 = por %p88, %p89
      %p91 = scmp.ne.s32.totalorder %s77, %s78
      %p92 = scmp.eq.s32.totalorder %s21, 1
      %p93 = por %p91, %p92
      %p95 = scmp.ne.s32.totalorder %s78, %s94
      %p96 = scmp.eq.s32.totalorder %s21, 0
      %p97 = por %p95, %p96
      %s98 = ssub.s32 %s22, %s41
      %s99 = ssub.s32 %s23, %s37
      %s100 = sor.u32 %s98, %s99
      %p101 = scmp.eq.s32.totalorder %s100, 0
      %s103 = sadd.s32 %s102, 1
      %s104 = scalar_select %p101, %s102, %s103
      %p107 = pneg %p101
      %p108 = scmp.eq.s32.totalorder %s15, 1
      %p109 = por %p107, %p108
      %p110 = scmp.ne.s32.totalorder %s102, %s105
      %p111 = scmp.eq.s32.totalorder %s15, 0
      %p112 = por %p110, %p111
      %p113 = scmp.ne.s32.totalorder %s102, %s105
      %p114 = scmp.eq.s32.totalorder %s20, 1
      %p115 = por %p113, %p114
      %p116 = scmp.ne.s32.totalorder %s105, %s106
      %p117 = scmp.eq.s32.totalorder %s20, 0
      %p118 = por %p116, %p117
      %p119 = scmp.ne.s32.totalorder %s105, %s106
      %p120 = scmp.eq.s32.totalorder %s21, 1
      %p121 = por %p119, %p120
      %p123 = scmp.ne.s32.totalorder %s106, %s122
      %p124 = scmp.eq.s32.totalorder %s21, 0
      %p125 = por %p123, %p124
      %p126 = scmp.le.s32.totalorder 1, %s15
      %p127 = scmp.lt.s32.totalorder %s15, 3
      %p128 = pnand %p126, %p127
      %p129 = pneg %p128
      // Predicated region
      $region9: #{tpu_custom_call.1} parent=5 // pred_check
        _
      $region10: #{tpu_custom_call.1} parent=5 // pred_check_branch
        %131 = sbr.rel (%p128) target = $region12
      $region11: #{tpu_custom_call.1} parent=5 // pred_region
        %s132 = ssub.s32 %s15, 1
      $region12: #{tpu_custom_call.1} parent=5 // pred_fallthru
        _
      %p133 = scmp.lt.s32.totalorder %s15, 2
      // Predicated region
      $region13: #{tpu_custom_call.1} parent=5 // pred_check
        %p134 = pneg %p133
      $region14: #{tpu_custom_call.1} parent=5 // pred_check_branch
        %136 = sbr.rel (%p134) target = $region16
      $region15: #{tpu_custom_call.1} parent=5 // pred_region
        // Predicated region
        $region17: #{tpu_custom_call.1} parent=15 // pred_check
          %p137 = pneg %p56
        $region18: #{tpu_custom_call.1} parent=15 // pred_check_branch
          %139 = sbr.rel (%p137) target = $region20
        $region19: #{tpu_custom_call.1} parent=15 // pred_region
          %s140 = sand.u32 %s46, 1
          %s141 = scalar_lea.sflag [#allocation4], %s140
          %s142 = sand.u32 %s46, 1
          %s143 = smul.addr %s142, 256
          %s144 = scalar_lea.vmem [#allocation3], %s143
          %s145 = smul.u32 8, %s22
          %s146 = smul.u32 8, %s24
          %148 = vsyncadd %s141, 0
          %s149 = smul.addr %s145, 16
          %s150 = sadd.s32 %s146, %s149
          %s151 = smul.addr %s150, 4
          %s152 = scalar_lea.hbm %s0, %s151
          %s153 = sshll.u32 %s152, 4
          %s154 = int_to_ptr.hbm [resolvable:$true] %s153
          %s155 = sshll.u32 %s144, 4
          %s156 = int_to_ptr.vmem [resolvable:$true] %s155
          %161 = dma.hbm_to_vmem [thread:$0]  %s154, 4096, %s156, %s141, 1024, 512, 32
        $region20: #{tpu_custom_call.1} parent=15 // pred_fallthru
          _
        // Predicated region
        $region21: #{tpu_custom_call.1} parent=15 // pred_check
          %p162 = pneg %p84
        $region22: #{tpu_custom_call.1} parent=15 // pred_check_branch
          %164 = sbr.rel (%p162) target = $region24
        $region23: #{tpu_custom_call.1} parent=15 // pred_region
          %s165 = sand.u32 %s74, 1
          %s166 = scalar_lea.sflag [#allocation7], %s165
          %s167 = sand.u32 %s74, 1
          %s168 = smul.addr %s167, 1024
          %s169 = scalar_lea.vmem [#allocation6], %s168
          %s170 = smul.u32 128, %s24
          %s171 = smul.u32 2, %s23
          %173 = vsyncadd %s166, 0
          %s174 = smul.addr %s170, 2
          %s175 = sadd.s32 %s171, %s174
          %s176 = smul.addr %s175, 4
          %s177 = scalar_lea.hbm %s1, %s176
          %s178 = sshll.u32 %s177, 4
          %s179 = int_to_ptr.hbm [resolvable:$true] %s178
          %s180 = sshll.u32 %s169, 4
          %s181 = int_to_ptr.vmem [resolvable:$true] %s180
          %186 = dma.hbm_to_vmem [thread:$0]  %s179, 16384, %s181, %s166, 128, 128, 8
        $region24: #{tpu_custom_call.1} parent=15 // pred_fallthru
          _
      $region16: #{tpu_custom_call.1} parent=5 // pred_fallthru
        _
      %p187 = scmp.le.s32.totalorder 1, %s15
      %p188 = scmp.lt.s32.totalorder %s15, 3
      %p189 = pnand %p187, %p188
      %p190 = pneg %p189
      // Predicated region
      $region25: #{tpu_custom_call.1} parent=5 // pred_check
        _
      $region26: #{tpu_custom_call.1} parent=5 // pred_check_branch
        %192 = sbr.rel (%p189) target = $region28
      $region27: #{tpu_custom_call.1} parent=5 // pred_region
        %s193 = ssub.s32 %s15, 1
        %s194 = sand.u32 %s49, 1
        %s195 = scalar_lea.sflag [#allocation4], %s194
        %s196 = sand.u32 %s49, 1
        %s197 = smul.addr %s196, 256
        %s198 = scalar_lea.vmem [#allocation3], %s197
        // Predicated region
        $region29: #{tpu_custom_call.1} parent=27 // pred_check
          %p199 = pneg %p62
        $region30: #{tpu_custom_call.1} parent=27 // pred_check_branch
          %201 = sbr.rel (%p199) target = $region32
        $region31: #{tpu_custom_call.1} parent=27 // pred_region
          %203 = dma.done %s195, 4096
        $region32: #{tpu_custom_call.1} parent=27 // pred_fallthru
          _
        %s204 = sand.u32 %s77, 1
        %s205 = scalar_lea.sflag [#allocation7], %s204
        %s206 = sand.u32 %s77, 1
        %s207 = smul.addr %s206, 1024
        %s208 = scalar_lea.vmem [#allocation6], %s207
        // Predicated region
        $region33: #{tpu_custom_call.1} parent=27 // pred_check
          %p209 = pneg %p90
        $region34: #{tpu_custom_call.1} parent=27 // pred_check_branch
          %211 = sbr.rel (%p209) target = $region36
        $region35: #{tpu_custom_call.1} parent=27 // pred_region
          %213 = dma.done %s205, 16384
        $region36: #{tpu_custom_call.1} parent=27 // pred_fallthru
          _
        %s214 = sand.u32 %s49, 1
        %s215 = scalar_lea.sflag [#allocation4], %s214
        %s216 = sand.u32 %s49, 1
        %s217 = smul.addr %s216, 256
        %s218 = scalar_lea.vmem [#allocation3], %s217
        %p219 = pneg %p62
        %p220 = pneg %p59
        %s221 = sand.u32 %s77, 1
        %s222 = scalar_lea.sflag [#allocation7], %s221
        %s223 = sand.u32 %s77, 1
        %s224 = smul.addr %s223, 1024
        %s225 = scalar_lea.vmem [#allocation6], %s224
        %p226 = pneg %p90
        %p227 = pneg %p87
        %p228 = pneg %p118
        %p229 = pneg %p115
        %s230 = smul.u32 8, %s25
        %s231 = smul.u32 8, %s27
        %s232 = smul.u32 128, %s27
        %s233 = smul.u32 2, %s26
        %s234 = smul.u32 8, %s25
        %s235 = smul.u32 2, %s26
        %p236 = scmp.eq.s32.totalorder %s27, 0
        // Predicated region
        $region37: #{tpu_custom_call.1} parent=27 // pred_check
          %p237 = pneg %p236
        $region38: #{tpu_custom_call.1} parent=27 // pred_check_branch
          %239 = sbr.rel (%p237) target = $region40
        $region39: #{tpu_custom_call.1} parent=27 // pred_region
          %240 = vst [vmem:[#allocation2] sm:$0xff] 0.0
          %241 = vst [vmem:[#allocation2 + $0x8] sm:$0xff] 0.0
          %242 = vst [vmem:[#allocation2 + $0x10] sm:$0xff] 0.0
          %243 = vst [vmem:[#allocation2 + $0x18] sm:$0xff] 0.0
          %244 = vst [vmem:[#allocation2 + $0x20] sm:$0xff] 0.0
          %245 = vst [vmem:[#allocation2 + $0x28] sm:$0xff] 0.0
          %246 = vst [vmem:[#allocation2 + $0x30] sm:$0xff] 0.0
          %247 = vst [vmem:[#allocation2 + $0x38] sm:$0xff] 0.0
          %248 = vst [vmem:[#allocation2 + $0x40] sm:$0xff] 0.0
          %249 = vst [vmem:[#allocation2 + $0x48] sm:$0xff] 0.0
          %250 = vst [vmem:[#allocation2 + $0x50] sm:$0xff] 0.0
          %251 = vst [vmem:[#allocation2 + $0x58] sm:$0xff] 0.0
          %252 = vst [vmem:[#allocation2 + $0x60] sm:$0xff] 0.0
          %253 = vst [vmem:[#allocation2 + $0x68] sm:$0xff] 0.0
          %254 = vst [vmem:[#allocation2 + $0x70] sm:$0xff] 0.0
          %255 = vst [vmem:[#allocation2 + $0x78] sm:$0xff] 0.0
        $region40: #{tpu_custom_call.1} parent=27 // pred_fallthru
          _
        %v256 = vld [vmem:[#allocation2] sm:$0xff]
        %v257 = vld [vmem:[#allocation2 + $0x8] sm:$0xff]
        %v258 = vld [vmem:[#allocation2 + $0x10] sm:$0xff]
        %v259 = vld [vmem:[#allocation2 + $0x18] sm:$0xff]
        %v260 = vld [vmem:[#allocation2 + $0x20] sm:$0xff]
        %v261 = vld [vmem:[#allocation2 + $0x28] sm:$0xff]
        %v262 = vld [vmem:[#allocation2 + $0x30] sm:$0xff]
        %v263 = vld [vmem:[#allocation2 + $0x38] sm:$0xff]
        %v264 = vld [vmem:[#allocation2 + $0x40] sm:$0xff]
        %v265 = vld [vmem:[#allocation2 + $0x48] sm:$0xff]
        %v266 = vld [vmem:[#allocation2 + $0x50] sm:$0xff]
        %v267 = vld [vmem:[#allocation2 + $0x58] sm:$0xff]
        %v268 = vld [vmem:[#allocation2 + $0x60] sm:$0xff]
        %v269 = vld [vmem:[#allocation2 + $0x68] sm:$0xff]
        %v270 = vld [vmem:[#allocation2 + $0x70] sm:$0xff]
        %v271 = vld [vmem:[#allocation2 + $0x78] sm:$0xff]
        %v272 = vld [vmem:[%s198] sm:$0xff]
        %v273 = vld [vmem:[%s198 + $0x8] sm:$0xff]
        %v274 = vld [vmem:[%s198 + $0x10] sm:$0xff]
        %v275 = vld [vmem:[%s198 + $0x18] sm:$0xff]
        %v276 = vld [vmem:[%s198 + $0x20] sm:$0xff]
        %v277 = vld [vmem:[%s198 + $0x28] sm:$0xff]
        %v278 = vld [vmem:[%s198 + $0x30] sm:$0xff]
        %v279 = vld [vmem:[%s198 + $0x38] sm:$0xff]
        %v280 = vld [vmem:[%s198 + $0x40] sm:$0xff]
        %v281 = vld [vmem:[%s198 + $0x48] sm:$0xff]
        %v282 = vld [vmem:[%s198 + $0x50] sm:$0xff]
        %v283 = vld [vmem:[%s198 + $0x58] sm:$0xff]
        %v284 = vld [vmem:[%s198 + $0x60] sm:$0xff]
        %v285 = vld [vmem:[%s198 + $0x68] sm:$0xff]
        %v286 = vld [vmem:[%s198 + $0x70] sm:$0xff]
        %v287 = vld [vmem:[%s198 + $0x78] sm:$0xff]
        %v288 = vld [vmem:[%s198 + $0x80] sm:$0xff]
        %v289 = vld [vmem:[%s198 + $0x88] sm:$0xff]
        %v290 = vld [vmem:[%s198 + $0x90] sm:$0xff]
        %v291 = vld [vmem:[%s198 + $0x98] sm:$0xff]
        %v292 = vld [vmem:[%s198 + $0xa0] sm:$0xff]
        %v293 = vld [vmem:[%s198 + $0xa8] sm:$0xff]
        %v294 = vld [vmem:[%s198 + $0xb0] sm:$0xff]
        %v295 = vld [vmem:[%s198 + $0xb8] sm:$0xff]
        %v296 = vld [vmem:[%s198 + $0xc0] sm:$0xff]
        %v297 = vld [vmem:[%s198 + $0xc8] sm:$0xff]
        %v298 = vld [vmem:[%s198 + $0xd0] sm:$0xff]
        %v299 = vld [vmem:[%s198 + $0xd8] sm:$0xff]
        %v300 = vld [vmem:[%s198 + $0xe0] sm:$0xff]
        %v301 = vld [vmem:[%s198 + $0xe8] sm:$0xff]
        %v302 = vld [vmem:[%s198 + $0xf0] sm:$0xff]
        %v303 = vld [vmem:[%s198 + $0xf8] sm:$0xff]
        %v304 = vld [vmem:[%s208] sm:$0xff]
        %v305 = vld [vmem:[%s208 + $0x8] sm:$0xff]
        %v306 = vld [vmem:[%s208 + $0x10] sm:$0xff]
        %v307 = vld [vmem:[%s208 + $0x18] sm:$0xff]
        %v308 = vld [vmem:[%s208 + $0x20] sm:$0xff]
        %v309 = vld [vmem:[%s208 + $0x28] sm:$0xff]
        %v310 = vld [vmem:[%s208 + $0x30] sm:$0xff]
        %v311 = vld [vmem:[%s208 + $0x38] sm:$0xff]
        %v312 = vld [vmem:[%s208 + $0x40] sm:$0xff]
        %v313 = vld [vmem:[%s208 + $0x48] sm:$0xff]
        %v314 = vld [vmem:[%s208 + $0x50] sm:$0xff]
        %v315 = vld [vmem:[%s208 + $0x58] sm:$0xff]
        %v316 = vld [vmem:[%s208 + $0x60] sm:$0xff]
        %v317 = vld [vmem:[%s208 + $0x68] sm:$0xff]
        %v318 = vld [vmem:[%s208 + $0x70] sm:$0xff]
        %v319 = vld [vmem:[%s208 + $0x78] sm:$0xff]
        %v320 = vld [vmem:[%s208 + $0x80] sm:$0xff]
        %v321 = vld [vmem:[%s208 + $0x88] sm:$0xff]
        %v322 = vld [vmem:[%s208 + $0x90] sm:$0xff]
        %v323 = vld [vmem:[%s208 + $0x98] sm:$0xff]
        %v324 = vld [vmem:[%s208 + $0xa0] sm:$0xff]
        %v325 = vld [vmem:[%s208 + $0xa8] sm:$0xff]
        %v326 = vld [vmem:[%s208 + $0xb0] sm:$0xff]
        %v327 = vld [vmem:[%s208 + $0xb8] sm:$0xff]
        %v328 = vld [vmem:[%s208 + $0xc0] sm:$0xff]
        %v329 = vld [vmem:[%s208 + $0xc8] sm:$0xff]
        %v330 = vld [vmem:[%s208 + $0xd0] sm:$0xff]
        %v331 = vld [vmem:[%s208 + $0xd8] sm:$0xff]
        %v332 = vld [vmem:[%s208 + $0xe0] sm:$0xff]
        %v333 = vld [vmem:[%s208 + $0xe8] sm:$0xff]
        %v334 = vld [vmem:[%s208 + $0xf0] sm:$0xff]
        %v335 = vld [vmem:[%s208 + $0xf8] sm:$0xff]
        %v336 = vld [vmem:[%s208 + $0x100] sm:$0xff]
        %v337 = vld [vmem:[%s208 + $0x108] sm:$0xff]
        %v338 = vld [vmem:[%s208 + $0x110] sm:$0xff]
        %v339 = vld [vmem:[%s208 + $0x118] sm:$0xff]
        %v340 = vld [vmem:[%s208 + $0x120] sm:$0xff]
        %v341 = vld [vmem:[%s208 + $0x128] sm:$0xff]
        %v342 = vld [vmem:[%s208 + $0x130] sm:$0xff]
        %v343 = vld [vmem:[%s208 + $0x138] sm:$0xff]
        %v344 = vld [vmem:[%s208 + $0x140] sm:$0xff]
        %v345 = vld [vmem:[%s208 + $0x148] sm:$0xff]
        %v346 = vld [vmem:[%s208 + $0x150] sm:$0xff]
        %v347 = vld [vmem:[%s208 + $0x158] sm:$0xff]
        %v348 = vld [vmem:[%s208 + $0x160] sm:$0xff]
        %v349 = vld [vmem:[%s208 + $0x168] sm:$0xff]
        %v350 = vld [vmem:[%s208 + $0x170] sm:$0xff]
        %v351 = vld [vmem:[%s208 + $0x178] sm:$0xff]
        %v352 = vld [vmem:[%s208 + $0x180] sm:$0xff]
        %v353 = vld [vmem:[%s208 + $0x188] sm:$0xff]
        %v354 = vld [vmem:[%s208 + $0x190] sm:$0xff]
        %v355 = vld [vmem:[%s208 + $0x198] sm:$0xff]
        %v356 = vld [vmem:[%s208 + $0x1a0] sm:$0xff]
        %v357 = vld [vmem:[%s208 + $0x1a8] sm:$0xff]
        %v358 = vld [vmem:[%s208 + $0x1b0] sm:$0xff]
        %v359 = vld [vmem:[%s208 + $0x1b8] sm:$0xff]
        %v360 = vld [vmem:[%s208 + $0x1c0] sm:$0xff]
        %v361 = vld [vmem:[%s208 + $0x1c8] sm:$0xff]
        %v362 = vld [vmem:[%s208 + $0x1d0] sm:$0xff]
        %v363 = vld [vmem:[%s208 + $0x1d8] sm:$0xff]
        %v364 = vld [vmem:[%s208 + $0x1e0] sm:$0xff]
        %v365 = vld [vmem:[%s208 + $0x1e8] sm:$0xff]
        %v366 = vld [vmem:[%s208 + $0x1f0] sm:$0xff]
        %v367 = vld [vmem:[%s208 + $0x1f8] sm:$0xff]
        %v368 = vld [vmem:[%s208 + $0x200] sm:$0xff]
        %v369 = vld [vmem:[%s208 + $0x208] sm:$0xff]
        %v370 = vld [vmem:[%s208 + $0x210] sm:$0xff]
        %v371 = vld [vmem:[%s208 + $0x218] sm:$0xff]
        %v372 = vld [vmem:[%s208 + $0x220] sm:$0xff]
        %v373 = vld [vmem:[%s208 + $0x228] sm:$0xff]
        %v374 = vld [vmem:[%s208 + $0x230] sm:$0xff]
        %v375 = vld [vmem:[%s208 + $0x238] sm:$0xff]
        %v376 = vld [vmem:[%s208 + $0x240] sm:$0xff]
        %v377 = vld [vmem:[%s208 + $0x248] sm:$0xff]
        %v378 = vld [vmem:[%s208 + $0x250] sm:$0xff]
        %v379 = vld [vmem:[%s208 + $0x258] sm:$0xff]
        %v380 = vld [vmem:[%s208 + $0x260] sm:$0xff]
        %v381 = vld [vmem:[%s208 + $0x268] sm:$0xff]
        %v382 = vld [vmem:[%s208 + $0x270] sm:$0xff]
        %v383 = vld [vmem:[%s208 + $0x278] sm:$0xff]
        %v384 = vld [vmem:[%s208 + $0x280] sm:$0xff]
        %v385 = vld [vmem:[%s208 + $0x288] sm:$0xff]
        %v386 = vld [vmem:[%s208 + $0x290] sm:$0xff]
        %v387 = vld [vmem:[%s208 + $0x298] sm:$0xff]
        %v388 = vld [vmem:[%s208 + $0x2a0] sm:$0xff]
        %v389 = vld [vmem:[%s208 + $0x2a8] sm:$0xff]
        %v390 = vld [vmem:[%s208 + $0x2b0] sm:$0xff]
        %v391 = vld [vmem:[%s208 + $0x2b8] sm:$0xff]
        %v392 = vld [vmem:[%s208 + $0x2c0] sm:$0xff]
        %v393 = vld [vmem:[%s208 + $0x2c8] sm:$0xff]
        %v394 = vld [vmem:[%s208 + $0x2d0] sm:$0xff]
        %v395 = vld [vmem:[%s208 + $0x2d8] sm:$0xff]
        %v396 = vld [vmem:[%s208 + $0x2e0] sm:$0xff]
        %v397 = vld [vmem:[%s208 + $0x2e8] sm:$0xff]
        %v398 = vld [vmem:[%s208 + $0x2f0] sm:$0xff]
        %v399 = vld [vmem:[%s208 + $0x2f8] sm:$0xff]
        %v400 = vld [vmem:[%s208 + $0x300] sm:$0xff]
        %v401 = vld [vmem:[%s208 + $0x308] sm:$0xff]
        %v402 = vld [vmem:[%s208 + $0x310] sm:$0xff]
        %v403 = vld [vmem:[%s208 + $0x318] sm:$0xff]
        %v404 = vld [vmem:[%s208 + $0x320] sm:$0xff]
        %v405 = vld [vmem:[%s208 + $0x328] sm:$0xff]
        %v406 = vld [vmem:[%s208 + $0x330] sm:$0xff]
        %v407 = vld [vmem:[%s208 + $0x338] sm:$0xff]
        %v408 = vld [vmem:[%s208 + $0x340] sm:$0xff]
        %v409 = vld [vmem:[%s208 + $0x348] sm:$0xff]
        %v410 = vld [vmem:[%s208 + $0x350] sm:$0xff]
        %v411 = vld [vmem:[%s208 + $0x358] sm:$0xff]
        %v412 = vld [vmem:[%s208 + $0x360] sm:$0xff]
        %v413 = vld [vmem:[%s208 + $0x368] sm:$0xff]
        %v414 = vld [vmem:[%s208 + $0x370] sm:$0xff]
        %v415 = vld [vmem:[%s208 + $0x378] sm:$0xff]
        %v416 = vld [vmem:[%s208 + $0x380] sm:$0xff]
        %v417 = vld [vmem:[%s208 + $0x388] sm:$0xff]
        %v418 = vld [vmem:[%s208 + $0x390] sm:$0xff]
        %v419 = vld [vmem:[%s208 + $0x398] sm:$0xff]
        %v420 = vld [vmem:[%s208 + $0x3a0] sm:$0xff]
        %v421 = vld [vmem:[%s208 + $0x3a8] sm:$0xff]
        %v422 = vld [vmem:[%s208 + $0x3b0] sm:$0xff]
        %v423 = vld [vmem:[%s208 + $0x3b8] sm:$0xff]
        %v424 = vld [vmem:[%s208 + $0x3c0] sm:$0xff]
        %v425 = vld [vmem:[%s208 + $0x3c8] sm:$0xff]
        %v426 = vld [vmem:[%s208 + $0x3d0] sm:$0xff]
        %v427 = vld [vmem:[%s208 + $0x3d8] sm:$0xff]
        %v428 = vld [vmem:[%s208 + $0x3e0] sm:$0xff]
        %v429 = vld [vmem:[%s208 + $0x3e8] sm:$0xff]
        %v430 = vld [vmem:[%s208 + $0x3f0] sm:$0xff]
        %v431 = vld [vmem:[%s208 + $0x3f8] sm:$0xff]
        %v464 = vunpack.c.l.b16 %v272
        %v465 = vunpack.c.h.b16 %v272
        %v466 = vunpack.c.l.b16 %v273
        %v467 = vunpack.c.h.b16 %v273
        %v468 = vunpack.c.l.b16 %v274
        %v469 = vunpack.c.h.b16 %v274
        %v470 = vunpack.c.l.b16 %v275
        %v471 = vunpack.c.h.b16 %v275
        %v472 = vunpack.c.l.b16 %v276
        %v473 = vunpack.c.h.b16 %v276
        %v474 = vunpack.c.l.b16 %v277
        %v475 = vunpack.c.h.b16 %v277
        %v476 = vunpack.c.l.b16 %v278
        %v477 = vunpack.c.h.b16 %v278
        %v478 = vunpack.c.l.b16 %v279
        %v479 = vunpack.c.h.b16 %v279
        %v480 = vunpack.c.l.b16 %v280
        %v481 = vunpack.c.h.b16 %v280
        %v482 = vunpack.c.l.b16 %v281
        %v483 = vunpack.c.h.b16 %v281
        %v484 = vunpack.c.l.b16 %v282
        %v485 = vunpack.c.h.b16 %v282
        %v486 = vunpack.c.l.b16 %v283
        %v487 = vunpack.c.h.b16 %v283
        %v488 = vunpack.c.l.b16 %v284
        %v489 = vunpack.c.h.b16 %v284
        %v490 = vunpack.c.l.b16 %v285
        %v491 = vunpack.c.h.b16 %v285
        %v492 = vunpack.c.l.b16 %v286
        %v493 = vunpack.c.h.b16 %v286
        %v494 = vunpack.c.l.b16 %v287
        %v495 = vunpack.c.h.b16 %v287
        %v496 = vunpack.c.l.b16 %v288
        %v497 = vunpack.c.h.b16 %v288
        %v498 = vunpack.c.l.b16 %v289
        %v499 = vunpack.c.h.b16 %v289
        %v500 = vunpack.c.l.b16 %v290
        %v501 = vunpack.c.h.b16 %v290
        %v502 = vunpack.c.l.b16 %v291
        %v503 = vunpack.c.h.b16 %v291
        %v504 = vunpack.c.l.b16 %v292
        %v505 = vunpack.c.h.b16 %v292
        %v506 = vunpack.c.l.b16 %v293
        %v507 = vunpack.c.h.b16 %v293
        %v508 = vunpack.c.l.b16 %v294
        %v509 = vunpack.c.h.b16 %v294
        %v510 = vunpack.c.l.b16 %v295
        %v511 = vunpack.c.h.b16 %v295
        %v512 = vunpack.c.l.b16 %v296
        %v513 = vunpack.c.h.b16 %v296
        %v514 = vunpack.c.l.b16 %v297
        %v515 = vunpack.c.h.b16 %v297
        %v516 = vunpack.c.l.b16 %v298
        %v517 = vunpack.c.h.b16 %v298
        %v518 = vunpack.c.l.b16 %v299
        %v519 = vunpack.c.h.b16 %v299
        %v520 = vunpack.c.l.b16 %v300
        %v521 = vunpack.c.h.b16 %v300
        %v522 = vunpack.c.l.b16 %v301
        %v523 = vunpack.c.h.b16 %v301
        %v524 = vunpack.c.l.b16 %v302
        %v525 = vunpack.c.h.b16 %v302
        %v526 = vunpack.c.l.b16 %v303
        %v527 = vunpack.c.h.b16 %v303
        %v528 = vpack.c.b16 %v472, %v464
        %v529 = vpack.c.b16 %v473, %v465
        %v530 = vpack.c.b16 %v474, %v466
        %v531 = vpack.c.b16 %v475, %v467
        %v532 = vpack.c.b16 %v476, %v468
        %v533 = vpack.c.b16 %v477, %v469
        %v534 = vpack.c.b16 %v478, %v470
        %v535 = vpack.c.b16 %v479, %v471
        %v536 = vpack.c.b16 %v488, %v480
        %v537 = vpack.c.b16 %v489, %v481
        %v538 = vpack.c.b16 %v490, %v482
        %v539 = vpack.c.b16 %v491, %v483
        %v540 = vpack.c.b16 %v492, %v484
        %v541 = vpack.c.b16 %v493, %v485
        %v542 = vpack.c.b16 %v494, %v486
        %v543 = vpack.c.b16 %v495, %v487
        %v544 = vpack.c.b16 %v504, %v496
        %v545 = vpack.c.b16 %v505, %v497
        %v546 = vpack.c.b16 %v506, %v498
        %v547 = vpack.c.b16 %v507, %v499
        %v548 = vpack.c.b16 %v508, %v500
        %v549 = vpack.c.b16 %v509, %v501
        %v550 = vpack.c.b16 %v510, %v502
        %v551 = vpack.c.b16 %v511, %v503
        %v552 = vpack.c.b16 %v520, %v512
        %v553 = vpack.c.b16 %v521, %v513
        %v554 = vpack.c.b16 %v522, %v514
        %v555 = vpack.c.b16 %v523, %v515
        %v556 = vpack.c.b16 %v524, %v516
        %v557 = vpack.c.b16 %v525, %v517
        %v558 = vpack.c.b16 %v526, %v518
        %v559 = vpack.c.b16 %v527, %v519
        %v720 = vunpack.c.l.b16 %v304
        %v721 = vunpack.c.h.b16 %v304
        %v722 = vunpack.c.l.b16 %v305
        %v723 = vunpack.c.h.b16 %v305
        %v724 = vunpack.c.l.b16 %v306
        %v725 = vunpack.c.h.b16 %v306
        %v726 = vunpack.c.l.b16 %v307
        %v727 = vunpack.c.h.b16 %v307
        %v728 = vunpack.c.l.b16 %v308
        %v729 = vunpack.c.h.b16 %v308
        %v730 = vunpack.c.l.b16 %v309
        %v731 = vunpack.c.h.b16 %v309
        %v732 = vunpack.c.l.b16 %v310
        %v733 = vunpack.c.h.b16 %v310
        %v734 = vunpack.c.l.b16 %v311
        %v735 = vunpack.c.h.b16 %v311
        %v736 = vunpack.c.l.b16 %v312
        %v737 = vunpack.c.h.b16 %v312
        %v738 = vunpack.c.l.b16 %v313
        %v739 = vunpack.c.h.b16 %v313
        %v740 = vunpack.c.l.b16 %v314
        %v741 = vunpack.c.h.b16 %v314
        %v742 = vunpack.c.l.b16 %v315
        %v743 = vunpack.c.h.b16 %v315
        %v744 = vunpack.c.l.b16 %v316
        %v745 = vunpack.c.h.b16 %v316
        %v746 = vunpack.c.l.b16 %v317
        %v747 = vunpack.c.h.b16 %v317
        %v748 = vunpack.c.l.b16 %v318
        %v749 = vunpack.c.h.b16 %v318
        %v750 = vunpack.c.l.b16 %v319
        %v751 = vunpack.c.h.b16 %v319
        %v752 = vunpack.c.l.b16 %v320
        %v753 = vunpack.c.h.b16 %v320
        %v754 = vunpack.c.l.b16 %v321
        %v755 = vunpack.c.h.b16 %v321
        %v756 = vunpack.c.l.b16 %v322
        %v757 = vunpack.c.h.b16 %v322
        %v758 = vunpack.c.l.b16 %v323
        %v759 = vunpack.c.h.b16 %v323
        %v760 = vunpack.c.l.b16 %v324
        %v761 = vunpack.c.h.b16 %v324
        %v762 = vunpack.c.l.b16 %v325
        %v763 = vunpack.c.h.b16 %v325
        %v764 = vunpack.c.l.b16 %v326
        %v765 = vunpack.c.h.b16 %v326
        %v766 = vunpack.c.l.b16 %v327
        %v767 = vunpack.c.h.b16 %v327
        %v768 = vunpack.c.l.b16 %v328
        %v769 = vunpack.c.h.b16 %v328
        %v770 = vunpack.c.l.b16 %v329
        %v771 = vunpack.c.h.b16 %v329
        %v772 = vunpack.c.l.b16 %v330
        %v773 = vunpack.c.h.b16 %v330
        %v774 = vunpack.c.l.b16 %v331
        %v775 = vunpack.c.h.b16 %v331
        %v776 = vunpack.c.l.b16 %v332
        %v777 = vunpack.c.h.b16 %v332
        %v778 = vunpack.c.l.b16 %v333
        %v779 = vunpack.c.h.b16 %v333
        %v780 = vunpack.c.l.b16 %v334
        %v781 = vunpack.c.h.b16 %v334
        %v782 = vunpack.c.l.b16 %v335
        %v783 = vunpack.c.h.b16 %v335
        %v784 = vunpack.c.l.b16 %v336
        %v785 = vunpack.c.h.b16 %v336
        %v786 = vunpack.c.l.b16 %v337
        %v787 = vunpack.c.h.b16 %v337
        %v788 = vunpack.c.l.b16 %v338
        %v789 = vunpack.c.h.b16 %v338
        %v790 = vunpack.c.l.b16 %v339
        %v791 = vunpack.c.h.b16 %v339
        %v792 = vunpack.c.l.b16 %v340
        %v793 = vunpack.c.h.b16 %v340
        %v794 = vunpack.c.l.b16 %v341
        %v795 = vunpack.c.h.b16 %v341
        %v796 = vunpack.c.l.b16 %v342
        %v797 = vunpack.c.h.b16 %v342
        %v798 = vunpack.c.l.b16 %v343
        %v799 = vunpack.c.h.b16 %v343
        %v800 = vunpack.c.l.b16 %v344
        %v801 = vunpack.c.h.b16 %v344
        %v802 = vunpack.c.l.b16 %v345
        %v803 = vunpack.c.h.b16 %v345
        %v804 = vunpack.c.l.b16 %v346
        %v805 = vunpack.c.h.b16 %v346
        %v806 = vunpack.c.l.b16 %v347
        %v807 = vunpack.c.h.b16 %v347
        %v808 = vunpack.c.l.b16 %v348
        %v809 = vunpack.c.h.b16 %v348
        %v810 = vunpack.c.l.b16 %v349
        %v811 = vunpack.c.h.b16 %v349
        %v812 = vunpack.c.l.b16 %v350
        %v813 = vunpack.c.h.b16 %v350
        %v814 = vunpack.c.l.b16 %v351
        %v815 = vunpack.c.h.b16 %v351
        %v816 = vunpack.c.l.b16 %v352
        %v817 = vunpack.c.h.b16 %v352
        %v818 = vunpack.c.l.b16 %v353
        %v819 = vunpack.c.h.b16 %v353
        %v820 = vunpack.c.l.b16 %v354
        %v821 = vunpack.c.h.b16 %v354
        %v822 = vunpack.c.l.b16 %v355
        %v823 = vunpack.c.h.b16 %v355
        %v824 = vunpack.c.l.b16 %v356
        %v825 = vunpack.c.h.b16 %v356
        %v826 = vunpack.c.l.b16 %v357
        %v827 = vunpack.c.h.b16 %v357
        %v828 = vunpack.c.l.b16 %v358
        %v829 = vunpack.c.h.b16 %v358
        %v830 = vunpack.c.l.b16 %v359
        %v831 = vunpack.c.h.b16 %v359
        %v832 = vunpack.c.l.b16 %v360
        %v833 = vunpack.c.h.b16 %v360
        %v834 = vunpack.c.l.b16 %v361
        %v835 = vunpack.c.h.b16 %v361
        %v836 = vunpack.c.l.b16 %v362
        %v837 = vunpack.c.h.b16 %v362
        %v838 = vunpack.c.l.b16 %v363
        %v839 = vunpack.c.h.b16 %v363
        %v840 = vunpack.c.l.b16 %v364
        %v841 = vunpack.c.h.b16 %v364
        %v842 = vunpack.c.l.b16 %v365
        %v843 = vunpack.c.h.b16 %v365
        %v844 = vunpack.c.l.b16 %v366
        %v845 = vunpack.c.h.b16 %v366
        %v846 = vunpack.c.l.b16 %v367
        %v847 = vunpack.c.h.b16 %v367
        %v848 = vunpack.c.l.b16 %v368
        %v849 = vunpack.c.h.b16 %v368
        %v850 = vunpack.c.l.b16 %v369
        %v851 = vunpack.c.h.b16 %v369
        %v852 = vunpack.c.l.b16 %v370
        %v853 = vunpack.c.h.b16 %v370
        %v854 = vunpack.c.l.b16 %v371
        %v855 = vunpack.c.h.b16 %v371
        %v856 = vunpack.c.l.b16 %v372
        %v857 = vunpack.c.h.b16 %v372
        %v858 = vunpack.c.l.b16 %v373
        %v859 = vunpack.c.h.b16 %v373
        %v860 = vunpack.c.l.b16 %v374
        %v861 = vunpack.c.h.b16 %v374
        %v862 = vunpack.c.l.b16 %v375
        %v863 = vunpack.c.h.b16 %v375
        %v864 = vunpack.c.l.b16 %v376
        %v865 = vunpack.c.h.b16 %v376
        %v866 = vunpack.c.l.b16 %v377
        %v867 = vunpack.c.h.b16 %v377
        %v868 = vunpack.c.l.b16 %v378
        %v869 = vunpack.c.h.b16 %v378
        %v870 = vunpack.c.l.b16 %v379
        %v871 = vunpack.c.h.b16 %v379
        %v872 = vunpack.c.l.b16 %v380
        %v873 = vunpack.c.h.b16 %v380
        %v874 = vunpack.c.l.b16 %v381
        %v875 = vunpack.c.h.b16 %v381
        %v876 = vunpack.c.l.b16 %v382
        %v877 = vunpack.c.h.b16 %v382
        %v878 = vunpack.c.l.b16 %v383
        %v879 = vunpack.c.h.b16 %v383
        %v880 = vunpack.c.l.b16 %v384
        %v881 = vunpack.c.h.b16 %v384
        %v882 = vunpack.c.l.b16 %v385
        %v883 = vunpack.c.h.b16 %v385
        %v884 = vunpack.c.l.b16 %v386
        %v885 = vunpack.c.h.b16 %v386
        %v886 = vunpack.c.l.b16 %v387
        %v887 = vunpack.c.h.b16 %v387
        %v888 = vunpack.c.l.b16 %v388
        %v889 = vunpack.c.h.b16 %v388
        %v890 = vunpack.c.l.b16 %v389
        %v891 = vunpack.c.h.b16 %v389
        %v892 = vunpack.c.l.b16 %v390
        %v893 = vunpack.c.h.b16 %v390
        %v894 = vunpack.c.l.b16 %v391
        %v895 = vunpack.c.h.b16 %v391
        %v896 = vunpack.c.l.b16 %v392
        %v897 = vunpack.c.h.b16 %v392
        %v898 = vunpack.c.l.b16 %v393
        %v899 = vunpack.c.h.b16 %v393
        %v900 = vunpack.c.l.b16 %v394
        %v901 = vunpack.c.h.b16 %v394
        %v902 = vunpack.c.l.b16 %v395
        %v903 = vunpack.c.h.b16 %v395
        %v904 = vunpack.c.l.b16 %v396
        %v905 = vunpack.c.h.b16 %v396
        %v906 = vunpack.c.l.b16 %v397
        %v907 = vunpack.c.h.b16 %v397
        %v908 = vunpack.c.l.b16 %v398
        %v909 = vunpack.c.h.b16 %v398
        %v910 = vunpack.c.l.b16 %v399
        %v911 = vunpack.c.h.b16 %v399
        %v912 = vunpack.c.l.b16 %v400
        %v913 = vunpack.c.h.b16 %v400
        %v914 = vunpack.c.l.b16 %v401
        %v915 = vunpack.c.h.b16 %v401
        %v916 = vunpack.c.l.b16 %v402
        %v917 = vunpack.c.h.b16 %v402
        %v918 = vunpack.c.l.b16 %v403
        %v919 = vunpack.c.h.b16 %v403
        %v920 = vunpack.c.l.b16 %v404
        %v921 = vunpack.c.h.b16 %v404
        %v922 = vunpack.c.l.b16 %v405
        %v923 = vunpack.c.h.b16 %v405
        %v924 = vunpack.c.l.b16 %v406
        %v925 = vunpack.c.h.b16 %v406
        %v926 = vunpack.c.l.b16 %v407
        %v927 = vunpack.c.h.b16 %v407
        %v928 = vunpack.c.l.b16 %v408
        %v929 = vunpack.c.h.b16 %v408
        %v930 = vunpack.c.l.b16 %v409
        %v931 = vunpack.c.h.b16 %v409
        %v932 = vunpack.c.l.b16 %v410
        %v933 = vunpack.c.h.b16 %v410
        %v934 = vunpack.c.l.b16 %v411
        %v935 = vunpack.c.h.b16 %v411
        %v936 = vunpack.c.l.b16 %v412
        %v937 = vunpack.c.h.b16 %v412
        %v938 = vunpack.c.l.b16 %v413
        %v939 = vunpack.c.h.b16 %v413
        %v940 = vunpack.c.l.b16 %v414
        %v941 = vunpack.c.h.b16 %v414
        %v942 = vunpack.c.l.b16 %v415
        %v943 = vunpack.c.h.b16 %v415
        %v944 = vunpack.c.l.b16 %v416
        %v945 = vunpack.c.h.b16 %v416
        %v946 = vunpack.c.l.b16 %v417
        %v947 = vunpack.c.h.b16 %v417
        %v948 = vunpack.c.l.b16 %v418
        %v949 = vunpack.c.h.b16 %v418
        %v950 = vunpack.c.l.b16 %v419
        %v951 = vunpack.c.h.b16 %v419
        %v952 = vunpack.c.l.b16 %v420
        %v953 = vunpack.c.h.b16 %v420
        %v954 = vunpack.c.l.b16 %v421
        %v955 = vunpack.c.h.b16 %v421
        %v956 = vunpack.c.l.b16 %v422
        %v957 = vunpack.c.h.b16 %v422
        %v958 = vunpack.c.l.b16 %v423
        %v959 = vunpack.c.h.b16 %v423
        %v960 = vunpack.c.l.b16 %v424
        %v961 = vunpack.c.h.b16 %v424
        %v962 = vunpack.c.l.b16 %v425
        %v963 = vunpack.c.h.b16 %v425
        %v964 = vunpack.c.l.b16 %v426
        %v965 = vunpack.c.h.b16 %v426
        %v966 = vunpack.c.l.b16 %v427
        %v967 = vunpack.c.h.b16 %v427
        %v968 = vunpack.c.l.b16 %v428
        %v969 = vunpack.c.h.b16 %v428
        %v970 = vunpack.c.l.b16 %v429
        %v971 = vunpack.c.h.b16 %v429
        %v972 = vunpack.c.l.b16 %v430
        %v973 = vunpack.c.h.b16 %v430
        %v974 = vunpack.c.l.b16 %v431
        %v975 = vunpack.c.h.b16 %v431
        %v976 = vpack.c.b16 %v722, %v720
        %v977 = vpack.c.b16 %v723, %v721
        %v978 = vpack.c.b16 %v726, %v724
        %v979 = vpack.c.b16 %v727, %v725
        %v980 = vpack.c.b16 %v730, %v728
        %v981 = vpack.c.b16 %v731, %v729
        %v982 = vpack.c.b16 %v734, %v732
        %v983 = vpack.c.b16 %v735, %v733
        %v984 = vpack.c.b16 %v738, %v736
        %v985 = vpack.c.b16 %v739, %v737
        %v986 = vpack.c.b16 %v742, %v740
        %v987 = vpack.c.b16 %v743, %v741
        %v988 = vpack.c.b16 %v746, %v744
        %v989 = vpack.c.b16 %v747, %v745
        %v990 = vpack.c.b16 %v750, %v748
        %v991 = vpack.c.b16 %v751, %v749
        %v992 = vpack.c.b16 %v754, %v752
        %v993 = vpack.c.b16 %v755, %v753
        %v994 = vpack.c.b16 %v758, %v756
        %v995 = vpack.c.b16 %v759, %v757
        %v996 = vpack.c.b16 %v762, %v760
        %v997 = vpack.c.b16 %v763, %v761
        %v998 = vpack.c.b16 %v766, %v764
        %v999 = vpack.c.b16 %v767, %v765
        %v1000 = vpack.c.b16 %v770, %v768
        %v1001 = vpack.c.b16 %v771, %v769
        %v1002 = vpack.c.b16 %v774, %v772
        %v1003 = vpack.c.b16 %v775, %v773
        %v1004 = vpack.c.b16 %v778, %v776
        %v1005 = vpack.c.b16 %v779, %v777
        %v1006 = vpack.c.b16 %v782, %v780
        %v1007 = vpack.c.b16 %v783, %v781
        %v1008 = vpack.c.b16 %v786, %v784
        %v1009 = vpack.c.b16 %v787, %v785
        %v1010 = vpack.c.b16 %v790, %v788
        %v1011 = vpack.c.b16 %v791, %v789
        %v1012 = vpack.c.b16 %v794, %v792
        %v1013 = vpack.c.b16 %v795, %v793
        %v1014 = vpack.c.b16 %v798, %v796
        %v1015 = vpack.c.b16 %v799, %v797
        %v1016 = vpack.c.b16 %v802, %v800
        %v1017 = vpack.c.b16 %v803, %v801
        %v1018 = vpack.c.b16 %v806, %v804
        %v1019 = vpack.c.b16 %v807, %v805
        %v1020 = vpack.c.b16 %v810, %v808
        %v1021 = vpack.c.b16 %v811, %v809
        %v1022 = vpack.c.b16 %v814, %v812
        %v1023 = vpack.c.b16 %v815, %v813
        %v1024 = vpack.c.b16 %v818, %v816
        %v1025 = vpack.c.b16 %v819, %v817
        %v1026 = vpack.c.b16 %v822, %v820
        %v1027 = vpack.c.b16 %v823, %v821
        %v1028 = vpack.c.b16 %v826, %v824
        %v1029 = vpack.c.b16 %v827, %v825
        %v1030 = vpack.c.b16 %v830, %v828
        %v1031 = vpack.c.b16 %v831, %v829
        %v1032 = vpack.c.b16 %v834, %v832
        %v1033 = vpack.c.b16 %v835, %v833
        %v1034 = vpack.c.b16 %v838, %v836
        %v1035 = vpack.c.b16 %v839, %v837
        %v1036 = vpack.c.b16 %v842, %v840
        %v1037 = vpack.c.b16 %v843, %v841
        %v1038 = vpack.c.b16 %v846, %v844
        %v1039 = vpack.c.b16 %v847, %v845
        %v1040 = vpack.c.b16 %v850, %v848
        %v1041 = vpack.c.b16 %v851, %v849
        %v1042 = vpack.c.b16 %v854, %v852
        %v1043 = vpack.c.b16 %v855, %v853
        %v1044 = vpack.c.b16 %v858, %v856
        %v1045 = vpack.c.b16 %v859, %v857
        %v1046 = vpack.c.b16 %v862, %v860
        %v1047 = vpack.c.b16 %v863, %v861
        %v1048 = vpack.c.b16 %v866, %v864
        %v1049 = vpack.c.b16 %v867, %v865
        %v1050 = vpack.c.b16 %v870, %v868
        %v1051 = vpack.c.b16 %v871, %v869
        %v1052 = vpack.c.b16 %v874, %v872
        %v1053 = vpack.c.b16 %v875, %v873
        %v1054 = vpack.c.b16 %v878, %v876
        %v1055 = vpack.c.b16 %v879, %v877
        %v1056 = vpack.c.b16 %v882, %v880
        %v1057 = vpack.c.b16 %v883, %v881
        %v1058 = vpack.c.b16 %v886, %v884
        %v1059 = vpack.c.b16 %v887, %v885
        %v1060 = vpack.c.b16 %v890, %v888
        %v1061 = vpack.c.b16 %v891, %v889
        %v1062 = vpack.c.b16 %v894, %v892
        %v1063 = vpack.c.b16 %v895, %v893
        %v1064 = vpack.c.b16 %v898, %v896
        %v1065 = vpack.c.b16 %v899, %v897
        %v1066 = vpack.c.b16 %v902, %v900
        %v1067 = vpack.c.b16 %v903, %v901
        %v1068 = vpack.c.b16 %v906, %v904
        %v1069 = vpack.c.b16 %v907, %v905
        %v1070 = vpack.c.b16 %v910, %v908
        %v1071 = vpack.c.b16 %v911, %v909
        %v1072 = vpack.c.b16 %v914, %v912
        %v1073 = vpack.c.b16 %v915, %v913
        %v1074 = vpack.c.b16 %v918, %v916
        %v1075 = vpack.c.b16 %v919, %v917
        %v1076 = vpack.c.b16 %v922, %v920
        %v1077 = vpack.c.b16 %v923, %v921
        %v1078 = vpack.c.b16 %v926, %v924
        %v1079 = vpack.c.b16 %v927, %v925
        %v1080 = vpack.c.b16 %v930, %v928
        %v1081 = vpack.c.b16 %v931, %v929
        %v1082 = vpack.c.b16 %v934, %v932
        %v1083 = vpack.c.b16 %v935, %v933
        %v1084 = vpack.c.b16 %v938, %v936
        %v1085 = vpack.c.b16 %v939, %v937
        %v1086 = vpack.c.b16 %v942, %v940
        %v1087 = vpack.c.b16 %v943, %v941
        %v1088 = vpack.c.b16 %v946, %v944
        %v1089 = vpack.c.b16 %v947, %v945
        %v1090 = vpack.c.b16 %v950, %v948
        %v1091 = vpack.c.b16 %v951, %v949
        %v1092 = vpack.c.b16 %v954, %v952
        %v1093 = vpack.c.b16 %v955, %v953
        %v1094 = vpack.c.b16 %v958, %v956
        %v1095 = vpack.c.b16 %v959, %v957
        %v1096 = vpack.c.b16 %v962, %v960
        %v1097 = vpack.c.b16 %v963, %v961
        %v1098 = vpack.c.b16 %v966, %v964
        %v1099 = vpack.c.b16 %v967, %v965
        %v1100 = vpack.c.b16 %v970, %v968
        %v1101 = vpack.c.b16 %v971, %v969
        %v1102 = vpack.c.b16 %v974, %v972
        %v1103 = vpack.c.b16 %v975, %v973
        %1232 = vmatpush.bf16.msra.mxu0 %v990
        %1233 = vmatpush.bf16.msra.mxu0 %v988
        %1234 = vmatpush.bf16.msra.mxu0 %v986
        %1235 = vmatpush.bf16.msra.mxu0 %v984
        %1236 = vmatpush.bf16.msra.mxu0 %v982
        %1237 = vmatpush.bf16.msra.mxu0 %v980
        %1238 = vmatpush.bf16.msra.mxu0 %v978
        %1239 = vmatpush.bf16.msra.mxu0 %v976
        %1240 = vmatmul.bf16.gmra.mxu0 %v528
        %v1241 = vpop.f32.mrf.mxu0
        %v1242 = vadd.f32 0.0, %v1241
        %v1243 = vpop.f32.mrf.mxu0
        %v1244 = vadd.f32 0.0, %v1243
        %1245 = vmatmul.bf16.gmra.mxu0 %v536
        %v1246 = vpop.f32.mrf.mxu0
        %v1247 = vadd.f32 0.0, %v1246
        %v1248 = vpop.f32.mrf.mxu0
        %v1249 = vadd.f32 0.0, %v1248
        %1250 = vmatmul.bf16.gmra.mxu0 %v544
        %v1251 = vpop.f32.mrf.mxu0
        %v1252 = vadd.f32 0.0, %v1251
        %v1253 = vpop.f32.mrf.mxu0
        %v1254 = vadd.f32 0.0, %v1253
        %1255 = vmatmul.bf16.gmra.mxu0 %v552
        %v1256 = vpop.f32.mrf.mxu0
        %v1257 = vadd.f32 0.0, %v1256
        %v1258 = vpop.f32.mrf.mxu0
        %v1259 = vadd.f32 0.0, %v1258
        %1260 = vdwg.mxu0
        %1261 = vmatpush.bf16.msra.mxu0 %v1006
        %1262 = vmatpush.bf16.msra.mxu0 %v1004
        %1263 = vmatpush.bf16.msra.mxu0 %v1002
        %1264 = vmatpush.bf16.msra.mxu0 %v1000
        %1265 = vmatpush.bf16.msra.mxu0 %v998
        %1266 = vmatpush.bf16.msra.mxu0 %v996
        %1267 = vmatpush.bf16.msra.mxu0 %v994
        %1268 = vmatpush.bf16.msra.mxu0 %v992
        %1269 = vmatmul.bf16.gmra.mxu0 %v529
        %v1270 = vpop.f32.mrf.mxu0
        %v1271 = vadd.f32 %v1242, %v1270
        %v1272 = vpop.f32.mrf.mxu0
        %v1273 = vadd.f32 %v1244, %v1272
        %1274 = vmatmul.bf16.gmra.mxu0 %v537
        %v1275 = vpop.f32.mrf.mxu0
        %v1276 = vadd.f32 %v1247, %v1275
        %v1277 = vpop.f32.mrf.mxu0
        %v1278 = vadd.f32 %v1249, %v1277
        %1279 = vmatmul.bf16.gmra.mxu0 %v545
        %v1280 = vpop.f32.mrf.mxu0
        %v1281 = vadd.f32 %v1252, %v1280
        %v1282 = vpop.f32.mrf.mxu0
        %v1283 = vadd.f32 %v1254, %v1282
        %1284 = vmatmul.bf16.gmra.mxu0 %v553
        %v1285 = vpop.f32.mrf.mxu0
        %v1286 = vadd.f32 %v1257, %v1285
        %v1287 = vpop.f32.mrf.mxu0
        %v1288 = vadd.f32 %v1259, %v1287
        %1289 = vdwg.mxu0
        %1290 = vmatpush.bf16.msra.mxu0 %v1022
        %1291 = vmatpush.bf16.msra.mxu0 %v1020
        %1292 = vmatpush.bf16.msra.mxu0 %v1018
        %1293 = vmatpush.bf16.msra.mxu0 %v1016
        %1294 = vmatpush.bf16.msra.mxu0 %v1014
        %1295 = vmatpush.bf16.msra.mxu0 %v1012
        %1296 = vmatpush.bf16.msra.mxu0 %v1010
        %1297 = vmatpush.bf16.msra.mxu0 %v1008
        %1298 = vmatmul.bf16.gmra.mxu0 %v530
        %v1299 = vpop.f32.mrf.mxu0
        %v1300 = vadd.f32 %v1271, %v1299
        %v1301 = vpop.f32.mrf.mxu0
        %v1302 = vadd.f32 %v1273, %v1301
        %1303 = vmatmul.bf16.gmra.mxu0 %v538
        %v1304 = vpop.f32.mrf.mxu0
        %v1305 = vadd.f32 %v1276, %v1304
        %v1306 = vpop.f32.mrf.mxu0
        %v1307 = vadd.f32 %v1278, %v1306
        %1308 = vmatmul.bf16.gmra.mxu0 %v546
        %v1309 = vpop.f32.mrf.mxu0
        %v1310 = vadd.f32 %v1281, %v1309
        %v1311 = vpop.f32.mrf.mxu0
        %v1312 = vadd.f32 %v1283, %v1311
        %1313 = vmatmul.bf16.gmra.mxu0 %v554
        %v1314 = vpop.f32.mrf.mxu0
        %v1315 = vadd.f32 %v1286, %v1314
        %v1316 = vpop.f32.mrf.mxu0
        %v1317 = vadd.f32 %v1288, %v1316
        %1318 = vdwg.mxu0
        %1319 = vmatpush.bf16.msra.mxu0 %v1038
        %1320 = vmatpush.bf16.msra.mxu0 %v1036
        %1321 = vmatpush.bf16.msra.mxu0 %v1034
        %1322 = vmatpush.bf16.msra.mxu0 %v1032
        %1323 = vmatpush.bf16.msra.mxu0 %v1030
        %1324 = vmatpush.bf16.msra.mxu0 %v1028
        %1325 = vmatpush.bf16.msra.mxu0 %v1026
        %1326 = vmatpush.bf16.msra.mxu0 %v1024
        %1327 = vmatmul.bf16.gmra.mxu0 %v531
        %v1328 = vpop.f32.mrf.mxu0
        %v1329 = vadd.f32 %v1300, %v1328
        %v1330 = vpop.f32.mrf.mxu0
        %v1331 = vadd.f32 %v1302, %v1330
        %1332 = vmatmul.bf16.gmra.mxu0 %v539
        %v1333 = vpop.f32.mrf.mxu0
        %v1334 = vadd.f32 %v1305, %v1333
        %v1335 = vpop.f32.mrf.mxu0
        %v1336 = vadd.f32 %v1307, %v1335
        %1337 = vmatmul.bf16.gmra.mxu0 %v547
        %v1338 = vpop.f32.mrf.mxu0
        %v1339 = vadd.f32 %v1310, %v1338
        %v1340 = vpop.f32.mrf.mxu0
        %v1341 = vadd.f32 %v1312, %v1340
        %1342 = vmatmul.bf16.gmra.mxu0 %v555
        %v1343 = vpop.f32.mrf.mxu0
        %v1344 = vadd.f32 %v1315, %v1343
        %v1345 = vpop.f32.mrf.mxu0
        %v1346 = vadd.f32 %v1317, %v1345
        %1347 = vdwg.mxu0
        %1348 = vmatpush.bf16.msra.mxu0 %v1054
        %1349 = vmatpush.bf16.msra.mxu0 %v1052
        %1350 = vmatpush.bf16.msra.mxu0 %v1050
        %1351 = vmatpush.bf16.msra.mxu0 %v1048
        %1352 = vmatpush.bf16.msra.mxu0 %v1046
        %1353 = vmatpush.bf16.msra.mxu0 %v1044
        %1354 = vmatpush.bf16.msra.mxu0 %v1042
        %1355 = vmatpush.bf16.msra.mxu0 %v1040
        %1356 = vmatmul.bf16.gmra.mxu0 %v532
        %v1357 = vpop.f32.mrf.mxu0
        %v1358 = vadd.f32 %v1329, %v1357
        %v1359 = vpop.f32.mrf.mxu0
        %v1360 = vadd.f32 %v1331, %v1359
        %1361 = vmatmul.bf16.gmra.mxu0 %v540
        %v1362 = vpop.f32.mrf.mxu0
        %v1363 = vadd.f32 %v1334, %v1362
        %v1364 = vpop.f32.mrf.mxu0
        %v1365 = vadd.f32 %v1336, %v1364
        %1366 = vmatmul.bf16.gmra.mxu0 %v548
        %v1367 = vpop.f32.mrf.mxu0
        %v1368 = vadd.f32 %v1339, %v1367
        %v1369 = vpop.f32.mrf.mxu0
        %v1370 = vadd.f32 %v1341, %v1369
        %1371 = vmatmul.bf16.gmra.mxu0 %v556
        %v1372 = vpop.f32.mrf.mxu0
        %v1373 = vadd.f32 %v1344, %v1372
        %v1374 = vpop.f32.mrf.mxu0
        %v1375 = vadd.f32 %v1346, %v1374
        %1376 = vdwg.mxu0
        %1377 = vmatpush.bf16.msra.mxu0 %v1070
        %1378 = vmatpush.bf16.msra.mxu0 %v1068
        %1379 = vmatpush.bf16.msra.mxu0 %v1066
        %1380 = vmatpush.bf16.msra.mxu0 %v1064
        %1381 = vmatpush.bf16.msra.mxu0 %v1062
        %1382 = vmatpush.bf16.msra.mxu0 %v1060
        %1383 = vmatpush.bf16.msra.mxu0 %v1058
        %1384 = vmatpush.bf16.msra.mxu0 %v1056
        %1385 = vmatmul.bf16.gmra.mxu0 %v533
        %v1386 = vpop.f32.mrf.mxu0
        %v1387 = vadd.f32 %v1358, %v1386
        %v1388 = vpop.f32.mrf.mxu0
        %v1389 = vadd.f32 %v1360, %v1388
        %1390 = vmatmul.bf16.gmra.mxu0 %v541
        %v1391 = vpop.f32.mrf.mxu0
        %v1392 = vadd.f32 %v1363, %v1391
        %v1393 = vpop.f32.mrf.mxu0
        %v1394 = vadd.f32 %v1365, %v1393
        %1395 = vmatmul.bf16.gmra.mxu0 %v549
        %v1396 = vpop.f32.mrf.mxu0
        %v1397 = vadd.f32 %v1368, %v1396
        %v1398 = vpop.f32.mrf.mxu0
        %v1399 = vadd.f32 %v1370, %v1398
        %1400 = vmatmul.bf16.gmra.mxu0 %v557
        %v1401 = vpop.f32.mrf.mxu0
        %v1402 = vadd.f32 %v1373, %v1401
        %v1403 = vpop.f32.mrf.mxu0
        %v1404 = vadd.f32 %v1375, %v1403
        %1405 = vdwg.mxu0
        %1406 = vmatpush.bf16.msra.mxu0 %v1086
        %1407 = vmatpush.bf16.msra.mxu0 %v1084
        %1408 = vmatpush.bf16.msra.mxu0 %v1082
        %1409 = vmatpush.bf16.msra.mxu0 %v1080
        %1410 = vmatpush.bf16.msra.mxu0 %v1078
        %1411 = vmatpush.bf16.msra.mxu0 %v1076
        %1412 = vmatpush.bf16.msra.mxu0 %v1074
        %1413 = vmatpush.bf16.msra.mxu0 %v1072
        %1414 = vmatmul.bf16.gmra.mxu0 %v534
        %v1415 = vpop.f32.mrf.mxu0
        %v1416 = vadd.f32 %v1387, %v1415
        %v1417 = vpop.f32.mrf.mxu0
        %v1418 = vadd.f32 %v1389, %v1417
        %1419 = vmatmul.bf16.gmra.mxu0 %v542
        %v1420 = vpop.f32.mrf.mxu0
        %v1421 = vadd.f32 %v1392, %v1420
        %v1422 = vpop.f32.mrf.mxu0
        %v1423 = vadd.f32 %v1394, %v1422
        %1424 = vmatmul.bf16.gmra.mxu0 %v550
        %v1425 = vpop.f32.mrf.mxu0
        %v1426 = vadd.f32 %v1397, %v1425
        %v1427 = vpop.f32.mrf.mxu0
        %v1428 = vadd.f32 %v1399, %v1427
        %1429 = vmatmul.bf16.gmra.mxu0 %v558
        %v1430 = vpop.f32.mrf.mxu0
        %v1431 = vadd.f32 %v1402, %v1430
        %v1432 = vpop.f32.mrf.mxu0
        %v1433 = vadd.f32 %v1404, %v1432
        %1434 = vdwg.mxu0
        %1435 = vmatpush.bf16.msra.mxu0 %v1102
        %1436 = vmatpush.bf16.msra.mxu0 %v1100
        %1437 = vmatpush.bf16.msra.mxu0 %v1098
        %1438 = vmatpush.bf16.msra.mxu0 %v1096
        %1439 = vmatpush.bf16.msra.mxu0 %v1094
        %1440 = vmatpush.bf16.msra.mxu0 %v1092
        %1441 = vmatpush.bf16.msra.mxu0 %v1090
        %1442 = vmatpush.bf16.msra.mxu0 %v1088
        %1443 = vmatmul.bf16.gmra.mxu0 %v535
        %v1444 = vpop.f32.mrf.mxu0
        %v1445 = vadd.f32 %v1416, %v1444
        %v1446 = vpop.f32.mrf.mxu0
        %v1447 = vadd.f32 %v1418, %v1446
        %1448 = vmatmul.bf16.gmra.mxu0 %v543
        %v1449 = vpop.f32.mrf.mxu0
        %v1450 = vadd.f32 %v1421, %v1449
        %v1451 = vpop.f32.mrf.mxu0
        %v1452 = vadd.f32 %v1423, %v1451
        %1453 = vmatmul.bf16.gmra.mxu0 %v551
        %v1454 = vpop.f32.mrf.mxu0
        %v1455 = vadd.f32 %v1426, %v1454
        %v1456 = vpop.f32.mrf.mxu0
        %v1457 = vadd.f32 %v1428, %v1456
        %1458 = vmatmul.bf16.gmra.mxu0 %v559
        %v1459 = vpop.f32.mrf.mxu0
        %v1460 = vadd.f32 %v1431, %v1459
        %v1461 = vpop.f32.mrf.mxu0
        %v1462 = vadd.f32 %v1433, %v1461
        %1463 = vdwg.mxu0
        %1464 = vmatpush.bf16.msra.mxu0 %v991
        %1465 = vmatpush.bf16.msra.mxu0 %v989
        %1466 = vmatpush.bf16.msra.mxu0 %v987
        %1467 = vmatpush.bf16.msra.mxu0 %v985
        %1468 = vmatpush.bf16.msra.mxu0 %v983
        %1469 = vmatpush.bf16.msra.mxu0 %v981
        %1470 = vmatpush.bf16.msra.mxu0 %v979
        %1471 = vmatpush.bf16.msra.mxu0 %v977
        %1472 = vmatmul.bf16.gmra.mxu0 %v528
        %v1473 = vpop.f32.mrf.mxu0
        %v1474 = vadd.f32 0.0, %v1473
        %v1475 = vpop.f32.mrf.mxu0
        %v1476 = vadd.f32 0.0, %v1475
        %1477 = vmatmul.bf16.gmra.mxu0 %v536
        %v1478 = vpop.f32.mrf.mxu0
        %v1479 = vadd.f32 0.0, %v1478
        %v1480 = vpop.f32.mrf.mxu0
        %v1481 = vadd.f32 0.0, %v1480
        %1482 = vmatmul.bf16.gmra.mxu0 %v544
        %v1483 = vpop.f32.mrf.mxu0
        %v1484 = vadd.f32 0.0, %v1483
        %v1485 = vpop.f32.mrf.mxu0
        %v1486 = vadd.f32 0.0, %v1485
        %1487 = vmatmul.bf16.gmra.mxu0 %v552
        %v1488 = vpop.f32.mrf.mxu0
        %v1489 = vadd.f32 0.0, %v1488
        %v1490 = vpop.f32.mrf.mxu0
        %v1491 = vadd.f32 0.0, %v1490
        %1492 = vdwg.mxu0
        %1493 = vmatpush.bf16.msra.mxu0 %v1007
        %1494 = vmatpush.bf16.msra.mxu0 %v1005
        %1495 = vmatpush.bf16.msra.mxu0 %v1003
        %1496 = vmatpush.bf16.msra.mxu0 %v1001
        %1497 = vmatpush.bf16.msra.mxu0 %v999
        %1498 = vmatpush.bf16.msra.mxu0 %v997
        %1499 = vmatpush.bf16.msra.mxu0 %v995
        %1500 = vmatpush.bf16.msra.mxu0 %v993
        %1501 = vmatmul.bf16.gmra.mxu0 %v529
        %v1502 = vpop.f32.mrf.mxu0
        %v1503 = vadd.f32 %v1474, %v1502
        %v1504 = vpop.f32.mrf.mxu0
        %v1505 = vadd.f32 %v1476, %v1504
        %1506 = vmatmul.bf16.gmra.mxu0 %v537
        %v1507 = vpop.f32.mrf.mxu0
        %v1508 = vadd.f32 %v1479, %v1507
        %v1509 = vpop.f32.mrf.mxu0
        %v1510 = vadd.f32 %v1481, %v1509
        %1511 = vmatmul.bf16.gmra.mxu0 %v545
        %v1512 = vpop.f32.mrf.mxu0
        %v1513 = vadd.f32 %v1484, %v1512
        %v1514 = vpop.f32.mrf.mxu0
        %v1515 = vadd.f32 %v1486, %v1514
        %1516 = vmatmul.bf16.gmra.mxu0 %v553
        %v1517 = vpop.f32.mrf.mxu0
        %v1518 = vadd.f32 %v1489, %v1517
        %v1519 = vpop.f32.mrf.mxu0
        %v1520 = vadd.f32 %v1491, %v1519
        %1521 = vdwg.mxu0
        %1522 = vmatpush.bf16.msra.mxu0 %v1023
        %1523 = vmatpush.bf16.msra.mxu0 %v1021
        %1524 = vmatpush.bf16.msra.mxu0 %v1019
        %1525 = vmatpush.bf16.msra.mxu0 %v1017
        %1526 = vmatpush.bf16.msra.mxu0 %v1015
        %1527 = vmatpush.bf16.msra.mxu0 %v1013
        %1528 = vmatpush.bf16.msra.mxu0 %v1011
        %1529 = vmatpush.bf16.msra.mxu0 %v1009
        %1530 = vmatmul.bf16.gmra.mxu0 %v530
        %v1531 = vpop.f32.mrf.mxu0
        %v1532 = vadd.f32 %v1503, %v1531
        %v1533 = vpop.f32.mrf.mxu0
        %v1534 = vadd.f32 %v1505, %v1533
        %1535 = vmatmul.bf16.gmra.mxu0 %v538
        %v1536 = vpop.f32.mrf.mxu0
        %v1537 = vadd.f32 %v1508, %v1536
        %v1538 = vpop.f32.mrf.mxu0
        %v1539 = vadd.f32 %v1510, %v1538
        %1540 = vmatmul.bf16.gmra.mxu0 %v546
        %v1541 = vpop.f32.mrf.mxu0
        %v1542 = vadd.f32 %v1513, %v1541
        %v1543 = vpop.f32.mrf.mxu0
        %v1544 = vadd.f32 %v1515, %v1543
        %1545 = vmatmul.bf16.gmra.mxu0 %v554
        %v1546 = vpop.f32.mrf.mxu0
        %v1547 = vadd.f32 %v1518, %v1546
        %v1548 = vpop.f32.mrf.mxu0
        %v1549 = vadd.f32 %v1520, %v1548
        %1550 = vdwg.mxu0
        %1551 = vmatpush.bf16.msra.mxu0 %v1039
        %1552 = vmatpush.bf16.msra.mxu0 %v1037
        %1553 = vmatpush.bf16.msra.mxu0 %v1035
        %1554 = vmatpush.bf16.msra.mxu0 %v1033
        %1555 = vmatpush.bf16.msra.mxu0 %v1031
        %1556 = vmatpush.bf16.msra.mxu0 %v1029
        %1557 = vmatpush.bf16.msra.mxu0 %v1027
        %1558 = vmatpush.bf16.msra.mxu0 %v1025
        %1559 = vmatmul.bf16.gmra.mxu0 %v531
        %v1560 = vpop.f32.mrf.mxu0
        %v1561 = vadd.f32 %v1532, %v1560
        %v1562 = vpop.f32.mrf.mxu0
        %v1563 = vadd.f32 %v1534, %v1562
        %1564 = vmatmul.bf16.gmra.mxu0 %v539
        %v1565 = vpop.f32.mrf.mxu0
        %v1566 = vadd.f32 %v1537, %v1565
        %v1567 = vpop.f32.mrf.mxu0
        %v1568 = vadd.f32 %v1539, %v1567
        %1569 = vmatmul.bf16.gmra.mxu0 %v547
        %v1570 = vpop.f32.mrf.mxu0
        %v1571 = vadd.f32 %v1542, %v1570
        %v1572 = vpop.f32.mrf.mxu0
        %v1573 = vadd.f32 %v1544, %v1572
        %1574 = vmatmul.bf16.gmra.mxu0 %v555
        %v1575 = vpop.f32.mrf.mxu0
        %v1576 = vadd.f32 %v1547, %v1575
        %v1577 = vpop.f32.mrf.mxu0
        %v1578 = vadd.f32 %v1549, %v1577
        %1579 = vdwg.mxu0
        %1580 = vmatpush.bf16.msra.mxu0 %v1055
        %1581 = vmatpush.bf16.msra.mxu0 %v1053
        %1582 = vmatpush.bf16.msra.mxu0 %v1051
        %1583 = vmatpush.bf16.msra.mxu0 %v1049
        %1584 = vmatpush.bf16.msra.mxu0 %v1047
        %1585 = vmatpush.bf16.msra.mxu0 %v1045
        %1586 = vmatpush.bf16.msra.mxu0 %v1043
        %1587 = vmatpush.bf16.msra.mxu0 %v1041
        %1588 = vmatmul.bf16.gmra.mxu0 %v532
        %v1589 = vpop.f32.mrf.mxu0
        %v1590 = vadd.f32 %v1561, %v1589
        %v1591 = vpop.f32.mrf.mxu0
        %v1592 = vadd.f32 %v1563, %v1591
        %1593 = vmatmul.bf16.gmra.mxu0 %v540
        %v1594 = vpop.f32.mrf.mxu0
        %v1595 = vadd.f32 %v1566, %v1594
        %v1596 = vpop.f32.mrf.mxu0
        %v1597 = vadd.f32 %v1568, %v1596
        %1598 = vmatmul.bf16.gmra.mxu0 %v548
        %v1599 = vpop.f32.mrf.mxu0
        %v1600 = vadd.f32 %v1571, %v1599
        %v1601 = vpop.f32.mrf.mxu0
        %v1602 = vadd.f32 %v1573, %v1601
        %1603 = vmatmul.bf16.gmra.mxu0 %v556
        %v1604 = vpop.f32.mrf.mxu0
        %v1605 = vadd.f32 %v1576, %v1604
        %v1606 = vpop.f32.mrf.mxu0
        %v1607 = vadd.f32 %v1578, %v1606
        %1608 = vdwg.mxu0
        %1609 = vmatpush.bf16.msra.mxu0 %v1071
        %1610 = vmatpush.bf16.msra.mxu0 %v1069
        %1611 = vmatpush.bf16.msra.mxu0 %v1067
        %1612 = vmatpush.bf16.msra.mxu0 %v1065
        %1613 = vmatpush.bf16.msra.mxu0 %v1063
        %1614 = vmatpush.bf16.msra.mxu0 %v1061
        %1615 = vmatpush.bf16.msra.mxu0 %v1059
        %1616 = vmatpush.bf16.msra.mxu0 %v1057
        %1617 = vmatmul.bf16.gmra.mxu0 %v533
        %v1618 = vpop.f32.mrf.mxu0
        %v1619 = vadd.f32 %v1590, %v1618
        %v1620 = vpop.f32.mrf.mxu0
        %v1621 = vadd.f32 %v1592, %v1620
        %1622 = vmatmul.bf16.gmra.mxu0 %v541
        %v1623 = vpop.f32.mrf.mxu0
        %v1624 = vadd.f32 %v1595, %v1623
        %v1625 = vpop.f32.mrf.mxu0
        %v1626 = vadd.f32 %v1597, %v1625
        %1627 = vmatmul.bf16.gmra.mxu0 %v549
        %v1628 = vpop.f32.mrf.mxu0
        %v1629 = vadd.f32 %v1600, %v1628
        %v1630 = vpop.f32.mrf.mxu0
        %v1631 = vadd.f32 %v1602, %v1630
        %1632 = vmatmul.bf16.gmra.mxu0 %v557
        %v1633 = vpop.f32.mrf.mxu0
        %v1634 = vadd.f32 %v1605, %v1633
        %v1635 = vpop.f32.mrf.mxu0
        %v1636 = vadd.f32 %v1607, %v1635
        %1637 = vdwg.mxu0
        %1638 = vmatpush.bf16.msra.mxu0 %v1087
        %1639 = vmatpush.bf16.msra.mxu0 %v1085
        %1640 = vmatpush.bf16.msra.mxu0 %v1083
        %1641 = vmatpush.bf16.msra.mxu0 %v1081
        %1642 = vmatpush.bf16.msra.mxu0 %v1079
        %1643 = vmatpush.bf16.msra.mxu0 %v1077
        %1644 = vmatpush.bf16.msra.mxu0 %v1075
        %1645 = vmatpush.bf16.msra.mxu0 %v1073
        %1646 = vmatmul.bf16.gmra.mxu0 %v534
        %v1647 = vpop.f32.mrf.mxu0
        %v1648 = vadd.f32 %v1619, %v1647
        %v1649 = vpop.f32.mrf.mxu0
        %v1650 = vadd.f32 %v1621, %v1649
        %1651 = vmatmul.bf16.gmra.mxu0 %v542
        %v1652 = vpop.f32.mrf.mxu0
        %v1653 = vadd.f32 %v1624, %v1652
        %v1654 = vpop.f32.mrf.mxu0
        %v1655 = vadd.f32 %v1626, %v1654
        %1656 = vmatmul.bf16.gmra.mxu0 %v550
        %v1657 = vpop.f32.mrf.mxu0
        %v1658 = vadd.f32 %v1629, %v1657
        %v1659 = vpop.f32.mrf.mxu0
        %v1660 = vadd.f32 %v1631, %v1659
        %1661 = vmatmul.bf16.gmra.mxu0 %v558
        %v1662 = vpop.f32.mrf.mxu0
        %v1663 = vadd.f32 %v1634, %v1662
        %v1664 = vpop.f32.mrf.mxu0
        %v1665 = vadd.f32 %v1636, %v1664
        %1666 = vdwg.mxu0
        %1667 = vmatpush.bf16.msra.mxu0 %v1103
        %1668 = vmatpush.bf16.msra.mxu0 %v1101
        %1669 = vmatpush.bf16.msra.mxu0 %v1099
        %1670 = vmatpush.bf16.msra.mxu0 %v1097
        %1671 = vmatpush.bf16.msra.mxu0 %v1095
        %1672 = vmatpush.bf16.msra.mxu0 %v1093
        %1673 = vmatpush.bf16.msra.mxu0 %v1091
        %1674 = vmatpush.bf16.msra.mxu0 %v1089
        %1675 = vmatmul.bf16.gmra.mxu0 %v535
        %v1676 = vpop.f32.mrf.mxu0
        %v1677 = vadd.f32 %v1648, %v1676
        %v1678 = vpop.f32.mrf.mxu0
        %v1679 = vadd.f32 %v1650, %v1678
        %1680 = vmatmul.bf16.gmra.mxu0 %v543
        %v1681 = vpop.f32.mrf.mxu0
        %v1682 = vadd.f32 %v1653, %v1681
        %v1683 = vpop.f32.mrf.mxu0
        %v1684 = vadd.f32 %v1655, %v1683
        %1685 = vmatmul.bf16.gmra.mxu0 %v551
        %v1686 = vpop.f32.mrf.mxu0
        %v1687 = vadd.f32 %v1658, %v1686
        %v1688 = vpop.f32.mrf.mxu0
        %v1689 = vadd.f32 %v1660, %v1688
        %1690 = vmatmul.bf16.gmra.mxu0 %v559
        %v1691 = vpop.f32.mrf.mxu0
        %v1692 = vadd.f32 %v1663, %v1691
        %v1693 = vpop.f32.mrf.mxu0
        %v1694 = vadd.f32 %v1665, %v1693
        %1695 = vdwg.mxu0
        %v1696 = vadd.f32 %v256, %v1445
        %v1697 = vadd.f32 %v257, %v1677
        %v1698 = vadd.f32 %v258, %v1447
        %v1699 = vadd.f32 %v259, %v1679
        %v1700 = vadd.f32 %v260, %v1450
        %v1701 = vadd.f32 %v261, %v1682
        %v1702 = vadd.f32 %v262, %v1452
        %v1703 = vadd.f32 %v263, %v1684
        %v1704 = vadd.f32 %v264, %v1455
        %v1705 = vadd.f32 %v265, %v1687
        %v1706 = vadd.f32 %v266, %v1457
        %v1707 = vadd.f32 %v267, %v1689
        %v1708 = vadd.f32 %v268, %v1460
        %v1709 = vadd.f32 %v269, %v1692
        %v1710 = vadd.f32 %v270, %v1462
        %v1711 = vadd.f32 %v271, %v1694
        %1712 = vst [vmem:[#allocation2] sm:$0xff] %v1696
        %1713 = vst [vmem:[#allocation2 + $0x8] sm:$0xff] %v1697
        %1714 = vst [vmem:[#allocation2 + $0x10] sm:$0xff] %v1698
        %1715 = vst [vmem:[#allocation2 + $0x18] sm:$0xff] %v1699
        %1716 = vst [vmem:[#allocation2 + $0x20] sm:$0xff] %v1700
        %1717 = vst [vmem:[#allocation2 + $0x28] sm:$0xff] %v1701
        %1718 = vst [vmem:[#allocation2 + $0x30] sm:$0xff] %v1702
        %1719 = vst [vmem:[#allocation2 + $0x38] sm:$0xff] %v1703
        %1720 = vst [vmem:[#allocation2 + $0x40] sm:$0xff] %v1704
        %1721 = vst [vmem:[#allocation2 + $0x48] sm:$0xff] %v1705
        %1722 = vst [vmem:[#allocation2 + $0x50] sm:$0xff] %v1706
        %1723 = vst [vmem:[#allocation2 + $0x58] sm:$0xff] %v1707
        %1724 = vst [vmem:[#allocation2 + $0x60] sm:$0xff] %v1708
        %1725 = vst [vmem:[#allocation2 + $0x68] sm:$0xff] %v1709
        %1726 = vst [vmem:[#allocation2 + $0x70] sm:$0xff] %v1710
        %1727 = vst [vmem:[#allocation2 + $0x78] sm:$0xff] %v1711
        %p1728 = scmp.eq.s32.totalorder %s27, 1
        // Predicated region
        $region41: #{tpu_custom_call.1} parent=27 // pred_check
          %p1729 = pneg %p1728
        $region42: #{tpu_custom_call.1} parent=27 // pred_check_branch
          %1731 = sbr.rel (%p1729) target = $region44
        $region43: #{tpu_custom_call.1} parent=27 // pred_region
          %v1732 = vld [vmem:[#allocation2] sm:$0xff]
          %v1733 = vld [vmem:[#allocation2 + $0x8] sm:$0xff]
          %v1734 = vld [vmem:[#allocation2 + $0x10] sm:$0xff]
          %v1735 = vld [vmem:[#allocation2 + $0x18] sm:$0xff]
          %v1736 = vld [vmem:[#allocation2 + $0x20] sm:$0xff]
          %v1737 = vld [vmem:[#allocation2 + $0x28] sm:$0xff]
          %v1738 = vld [vmem:[#allocation2 + $0x30] sm:$0xff]
          %v1739 = vld [vmem:[#allocation2 + $0x38] sm:$0xff]
          %v1740 = vld [vmem:[#allocation2 + $0x40] sm:$0xff]
          %v1741 = vld [vmem:[#allocation2 + $0x48] sm:$0xff]
          %v1742 = vld [vmem:[#allocation2 + $0x50] sm:$0xff]
          %v1743 = vld [vmem:[#allocation2 + $0x58] sm:$0xff]
          %v1744 = vld [vmem:[#allocation2 + $0x60] sm:$0xff]
          %v1745 = vld [vmem:[#allocation2 + $0x68] sm:$0xff]
          %v1746 = vld [vmem:[#allocation2 + $0x70] sm:$0xff]
          %v1747 = vld [vmem:[#allocation2 + $0x78] sm:$0xff]
          %1748 = vst [vmem:[#allocation8] sm:$0xff] %v1732
          %1749 = vst [vmem:[#allocation8 + $0x8] sm:$0xff] %v1733
          %1750 = vst [vmem:[#allocation8 + $0x10] sm:$0xff] %v1734
          %1751 = vst [vmem:[#allocation8 + $0x18] sm:$0xff] %v1735
          %1752 = vst [vmem:[#allocation8 + $0x20] sm:$0xff] %v1736
          %1753 = vst [vmem:[#allocation8 + $0x28] sm:$0xff] %v1737
          %1754 = vst [vmem:[#allocation8 + $0x30] sm:$0xff] %v1738
          %1755 = vst [vmem:[#allocation8 + $0x38] sm:$0xff] %v1739
          %1756 = vst [vmem:[#allocation8 + $0x40] sm:$0xff] %v1740
          %1757 = vst [vmem:[#allocation8 + $0x48] sm:$0xff] %v1741
          %1758 = vst [vmem:[#allocation8 + $0x50] sm:$0xff] %v1742
          %1759 = vst [vmem:[#allocation8 + $0x58] sm:$0xff] %v1743
          %1760 = vst [vmem:[#allocation8 + $0x60] sm:$0xff] %v1744
          %1761 = vst [vmem:[#allocation8 + $0x68] sm:$0xff] %v1745
          %1762 = vst [vmem:[#allocation8 + $0x70] sm:$0xff] %v1746
          %1763 = vst [vmem:[#allocation8 + $0x78] sm:$0xff] %v1747
        $region44: #{tpu_custom_call.1} parent=27 // pred_fallthru
          _
        // Predicated region
        $region45: #{tpu_custom_call.1} parent=27 // pred_check
          %p1764 = pneg %p115
        $region46: #{tpu_custom_call.1} parent=27 // pred_check_branch
          %1766 = sbr.rel (%p1764) target = $region48
        $region47: #{tpu_custom_call.1} parent=27 // pred_region
          %s1767 = smul.u32 8, %s25
          %s1768 = smul.u32 2, %s26
          %1770 = vsyncadd [#allocation5], 0
          %s1771 = smul.addr %s1767, 2
          %s1772 = sadd.s32 %s1768, %s1771
          %s1773 = smul.addr %s1772, 8
          %s1774 = scalar_lea.hbm %s2, %s1773
          %s1775 = sshll.u32 [#allocation8], 4
          %s1776 = int_to_ptr.vmem [resolvable:$true] %s1775
          %s1777 = sshll.u32 %s1774, 4
          %s1778 = int_to_ptr.hbm [resolvable:$true] %s1777
          %1783 = dma.vmem_to_hbm [thread:$0]  %s1776, 2048, %s1778, [#allocation5], 256, 256, 16
        $region48: #{tpu_custom_call.1} parent=27 // pred_fallthru
          _
        // Predicated region
        $region49: #{tpu_custom_call.1} parent=27 // pred_check
          %p1784 = pneg %p115
        $region50: #{tpu_custom_call.1} parent=27 // pred_check_branch
          %1786 = sbr.rel (%p1784) target = $region52
        $region51: #{tpu_custom_call.1} parent=27 // pred_region
          %1788 = dma.done [#allocation5], 2048
        $region52: #{tpu_custom_call.1} parent=27 // pred_fallthru
          _
      $region28: #{tpu_custom_call.1} parent=5 // pred_fallthru
        _
      %p1789 = scmp.le.s32.totalorder 2, %s15
      // Predicated region
      $region53: #{tpu_custom_call.1} parent=5 // pred_check
        %p1790 = pneg %p1789
      $region54: #{tpu_custom_call.1} parent=5 // pred_check_branch
        %1792 = sbr.rel (%p1790) target = $region56
      $region55: #{tpu_custom_call.1} parent=5 // pred_region
        %s1793 = ssub.s32 %s15, 2
      $region56: #{tpu_custom_call.1} parent=5 // pred_fallthru
        _
    $region6: #{tpu_custom_call.1} parent=1 // loop_footer
      %s19 = sadd.s32 1, %s15
    $region7: #{tpu_custom_call.1} parent=1 // loop_footer_branch
      %14 = sbr.rel target = $region3
    $region8: #{tpu_custom_call.1} parent=1 // loop_exit
      _
    %1794 = vsyncpa [#allocation4], 1
    %s1795 = scalar_lea.sflag [#allocation4], 1
    %1796 = vsyncpa %s1795, 1
    %1797 = vsyncpa [#allocation7], 1
    %s1798 = scalar_lea.sflag [#allocation7], 1
    %1799 = vsyncpa %s1798, 1
    %1800 = vsyncpa [#allocation5], 1
    %s1801 = scalar_lea.sflag [#allocation5], 1
    %1802 = vsyncpa %s1801, 1

</llo_original>
